<compile_context>
chip_gen: v7x
topology: tpu7x:2x2x1
jax: 0.10.0
libtpu: 0.0.40
codegen_flags: <defaults>
</compile_context>

<pallas_src>
import functools
import math

import jax
import jax.numpy as jnp
from jax import lax
from jax.experimental import pallas as pl
from jax.experimental.pallas import tpu as pltpu


def _mha_fused_kernel(xq_ref, xk_ref, xv_ref, wq_ref, wk_ref, wv_ref, wo_ref,
                      out_ref, *, num_heads, scale, approx_recip):
    # blocks: xq/xk/xv (1, S, Din); wq/wk/wv (Din, E); wo (E, E) (transposed so
    # y = ctx @ wo); out (1, S, E)
    mm_dtype = xq_ref.dtype

    xq = xq_ref[0]                     # (S, Din)
    xk = xk_ref[0]
    xv = xv_ref[0]

    # Full-width projections: one (S, Din) x (Din, E) matmul each.
    q_all = jnp.dot(xq, wq_ref[...], preferred_element_type=jnp.float32)  # (S, E) f32
    k_all = jnp.dot(xk, wk_ref[...], preferred_element_type=jnp.float32)
    v_all = jnp.dot(xv, wv_ref[...], preferred_element_type=jnp.float32)

    S, E = q_all.shape
    D = E // num_heads

    # TODO(synk): for large S the per-head (S, S) scores block should be
    # KV-tiled flash-style (online softmax) to stay within v7x's 64 MiB VMEM;
    # at these shapes the full block fits trivially.
    out_acc = jnp.zeros((S, E), dtype=jnp.float32)
    for h in range(num_heads):         # static unroll; static lane slices
        lo = h * D
        q_h = q_all[:, lo:lo + D].astype(mm_dtype)   # (S, D)
        k_h = k_all[:, lo:lo + D].astype(mm_dtype)
        v_h = v_all[:, lo:lo + D].astype(mm_dtype)

        # Contract on the head dim of BOTH operands — no k.T materialization.
        scores = lax.dot_general(
            q_h, k_h, (((1,), (1,)), ((), ())),
            preferred_element_type=jnp.float32) * scale             # (S, S) f32

        # Softmax in f32; reciprocal on the EUP slot, then a multiply.
        m = jnp.max(scores, axis=-1, keepdims=True)
        p = jnp.exp(scores - m)
        inv_l = pl.reciprocal(jnp.sum(p, axis=-1, keepdims=True),
                              approx=approx_recip)
        attn = (p * inv_l).astype(mm_dtype)
        # TODO(synk): attention dropout (p=0.1) and the optional `mask` argument
        # are omitted — eval-mode, mask=None semantics of the reference forward.

        ctx_h = jnp.dot(attn, v_h, preferred_element_type=jnp.float32)   # (S, D)

        # Fused output projection: accumulate ctx_h @ wo_h (D-row slab of wo.T).
        wo_h = wo_ref[lo:lo + D, :]                                       # (D, E)
        out_acc = out_acc + jnp.dot(ctx_h.astype(mm_dtype), wo_h,
                                    preferred_element_type=jnp.float32)

    out_ref[0] = out_acc.astype(out_ref.dtype)   # lane-dense (S, E) store


def multihead_attention(inputs_Q, inputs_K, inputs_V, wq, wk, wv, wo, num_heads,
                        *, compute_dtype=jnp.bfloat16):
    """wq/wk/wv: (embed_dim, input_dim), wo: (embed_dim, embed_dim)
       (torch nn.Linear weight layout, bias=False)."""
    B, S, Din = inputs_Q.shape
    E = wq.shape[0]
    assert E % num_heads == 0
    D = E // num_heads
    scale = 1.0 / math.sqrt(float(D))

    # Precompute x @ w weight layouts once (contiguous tiles for the DMAs).
    wq_t = jnp.asarray(wq.T, dtype=compute_dtype)   # (Din, E)
    wk_t = jnp.asarray(wk.T, dtype=compute_dtype)
    wv_t = jnp.asarray(wv.T, dtype=compute_dtype)
    wo_t = jnp.asarray(wo.T, dtype=compute_dtype)   # (E, E)

    xq = inputs_Q.astype(compute_dtype)
    xk = inputs_K.astype(compute_dtype)
    xv = inputs_V.astype(compute_dtype)

    approx = jnp.dtype(compute_dtype) != jnp.dtype(jnp.float32)

    kernel = functools.partial(_mha_fused_kernel, num_heads=num_heads,
                               scale=scale, approx_recip=bool(approx))

    return pl.pallas_call(
        kernel,
        out_shape=jax.ShapeDtypeStruct((B, S, E), jnp.float32),
        grid_spec=pltpu.PrefetchScalarGridSpec(
            num_scalar_prefetch=0,
            grid=(B,),
            in_specs=[
                pl.BlockSpec((1, S, Din), lambda b: (b, 0, 0)),
                pl.BlockSpec((1, S, Din), lambda b: (b, 0, 0)),
                pl.BlockSpec((1, S, Din), lambda b: (b, 0, 0)),
                pl.BlockSpec((Din, E), lambda b: (0, 0)),
                pl.BlockSpec((Din, E), lambda b: (0, 0)),
                pl.BlockSpec((Din, E), lambda b: (0, 0)),
                pl.BlockSpec((E, E), lambda b: (0, 0)),
            ],
            out_specs=pl.BlockSpec((1, S, E), lambda b: (b, 0, 0)),
        ),
        compiler_params=pltpu.CompilerParams(
            dimension_semantics=("parallel",)),   # batch shards across v7x's 2 TCs
    )(xq, xk, xv, wq_t, wk_t, wv_t, wo_t)


def _reference(inputs_Q, inputs_K, inputs_V, wq, wk, wv, wo, num_heads):
    """Pure-JAX replica of the PyTorch forward (eval mode, mask=None)."""
    B, S, _ = inputs_Q.shape
    E = wq.shape[0]
    H = num_heads
    D = E // H
    q = inputs_Q @ wq.T
    k = inputs_K @ wk.T
    v = inputs_V @ wv.T
    q = q.reshape(B, S, H, D).transpose(0, 2, 1, 3)
    k = k.reshape(B, S, H, D).transpose(0, 2, 1, 3)
    v = v.reshape(B, S, H, D).transpose(0, 2, 1, 3)
    scores = jnp.einsum("bhqd,bhkd->bhqk", q, k) / math.sqrt(float(D))
    attn = jax.nn.softmax(scores, axis=-1)
    x = jnp.einsum("bhqk,bhkd->bhqd", attn, v)
    x = x.transpose(0, 2, 1, 3).reshape(B, S, E)
    return x @ wo.T


if __name__ == "__main__":
    # small shapes consistent with the module
    B, S, INPUT_DIM, EMBED_DIM, NUM_HEADS = 2, 8, 16, 32, 4

    key = jax.random.PRNGKey(0)
    k_q, k_k, k_v, k_wq, k_wk, k_wv, k_wo = jax.random.split(key, 7)

    inputs_Q = jax.random.normal(k_q, (B, S, INPUT_DIM), dtype=jnp.float32)
    inputs_K = jax.random.normal(k_k, (B, S, INPUT_DIM), dtype=jnp.float32)
    inputs_V = jax.random.normal(k_v, (B, S, INPUT_DIM), dtype=jnp.float32)

    # deterministic weight init, torch nn.Linear-style uniform(-1/sqrt(fan_in), 1/sqrt(fan_in))
    bnd_in = 1.0 / math.sqrt(INPUT_DIM)
    bnd_e = 1.0 / math.sqrt(EMBED_DIM)
    wq = jax.random.uniform(k_wq, (EMBED_DIM, INPUT_DIM), jnp.float32, -bnd_in, bnd_in)
    wk = jax.random.uniform(k_wk, (EMBED_DIM, INPUT_DIM), jnp.float32, -bnd_in, bnd_in)
    wv = jax.random.uniform(k_wv, (EMBED_DIM, INPUT_DIM), jnp.float32, -bnd_in, bnd_in)
    wo = jax.random.uniform(k_wo, (EMBED_DIM, EMBED_DIM), jnp.float32, -bnd_e, bnd_e)

    ref = _reference(inputs_Q, inputs_K, inputs_V, wq, wk, wv, wo, NUM_HEADS)

    # f32 operand path: tight numerical check against the pure-JAX reference.
    out_f32 = multihead_attention(inputs_Q, inputs_K, inputs_V, wq, wk, wv, wo,
                                  NUM_HEADS, compute_dtype=jnp.float32)
    out_f32 = jax.block_until_ready(out_f32)
    assert out_f32.shape == (B, S, EMBED_DIM), out_f32.shape
    assert jnp.allclose(out_f32, ref, atol=1e-3, rtol=1e-3), \
        float(jnp.max(jnp.abs(out_f32 - ref)))

    # bf16 operand path (MXU-peak configuration recommended by the perf review):
    # looser tolerance due to bf16 operand quantization (f32 accumulation kept).
    out_bf16 = multihead_attention(inputs_Q, inputs_K, inputs_V, wq, wk, wv, wo,
                                   NUM_HEADS, compute_dtype=jnp.bfloat16)
    out_bf16 = jax.block_until_ready(out_bf16)
    assert out_bf16.shape == (B, S, EMBED_DIM), out_bf16.shape
    assert jnp.allclose(out_bf16, ref, atol=5e-2, rtol=5e-2), \
        float(jnp.max(jnp.abs(out_bf16 - ref)))

    print("KERNEL_OK")
</pallas_src>

<mosaic_0001>
module attributes {stable_mosaic.version = 11 : i64} {
  func.func @_mha_fused_kernel(%arg0: i32, %arg1: memref<1x8x16xf32, #tpu.memory_space<vmem>>, %arg2: memref<1x8x16xf32, #tpu.memory_space<vmem>>, %arg3: memref<1x8x16xf32, #tpu.memory_space<vmem>>, %arg4: memref<16x32xf32, #tpu.memory_space<vmem>>, %arg5: memref<16x32xf32, #tpu.memory_space<vmem>>, %arg6: memref<16x32xf32, #tpu.memory_space<vmem>>, %arg7: memref<32x32xf32, #tpu.memory_space<vmem>>, %arg8: memref<1x8x32xf32, #tpu.memory_space<vmem>>) attributes {dimension_semantics = [#tpu.dimension_semantics<parallel>], iteration_bounds = array<i64: 2>, scalar_prefetch = 0 : i64, scratch_operands = 0 : i64, tpu.core_type = #tpu.core_type<tc>, window_params = [{transform_indices = @transform_0, window_bounds = array<i64: 1, 8, 16>}, {transform_indices = @transform_1, window_bounds = array<i64: 1, 8, 16>}, {transform_indices = @transform_2, window_bounds = array<i64: 1, 8, 16>}, {pipeline_mode = #tpu.pipeline_mode<synchronous>, transform_indices = @transform_3, window_bounds = array<i64: 16, 32>}, {pipeline_mode = #tpu.pipeline_mode<synchronous>, transform_indices = @transform_4, window_bounds = array<i64: 16, 32>}, {pipeline_mode = #tpu.pipeline_mode<synchronous>, transform_indices = @transform_5, window_bounds = array<i64: 16, 32>}, {pipeline_mode = #tpu.pipeline_mode<synchronous>, transform_indices = @transform_6, window_bounds = array<i64: 32, 32>}, {transform_indices = @transform_7, window_bounds = array<i64: 1, 8, 32>}]} {
    %c0 = arith.constant 0 : index
    %c0_0 = arith.constant 0 : index
    %c0_1 = arith.constant 0 : index
    %0 = vector.load %arg1[%c0, %c0_0, %c0_1] : memref<1x8x16xf32, #tpu.memory_space<vmem>>, vector<1x8x16xf32>
    %1 = vector.shape_cast %0 : vector<1x8x16xf32> to vector<8x16xf32>
    %c0_2 = arith.constant 0 : index
    %c0_3 = arith.constant 0 : index
    %c0_4 = arith.constant 0 : index
    %2 = vector.load %arg2[%c0_2, %c0_3, %c0_4] : memref<1x8x16xf32, #tpu.memory_space<vmem>>, vector<1x8x16xf32>
    %3 = vector.shape_cast %2 : vector<1x8x16xf32> to vector<8x16xf32>
    %c0_5 = arith.constant 0 : index
    %c0_6 = arith.constant 0 : index
    %c0_7 = arith.constant 0 : index
    %4 = vector.load %arg3[%c0_5, %c0_6, %c0_7] : memref<1x8x16xf32, #tpu.memory_space<vmem>>, vector<1x8x16xf32>
    %5 = vector.shape_cast %4 : vector<1x8x16xf32> to vector<8x16xf32>
    %c0_8 = arith.constant 0 : index
    %c0_9 = arith.constant 0 : index
    %6 = vector.load %arg4[%c0_8, %c0_9] : memref<16x32xf32, #tpu.memory_space<vmem>>, vector<16x32xf32>
    %cst = arith.constant dense<0.000000e+00> : vector<8x32xf32>
    %7 = tpu.matmul %1, %6, %cst {dimension_numbers = #tpu.dot_dimension_numbers<[1], [0], [0], [1], [0, 0, 1, 1], [], []>} : vector<8x16xf32>, vector<16x32xf32>, vector<8x32xf32> -> vector<8x32xf32>
    %c0_10 = arith.constant 0 : index
    %c0_11 = arith.constant 0 : index
    %8 = vector.load %arg5[%c0_10, %c0_11] : memref<16x32xf32, #tpu.memory_space<vmem>>, vector<16x32xf32>
    %cst_12 = arith.constant dense<0.000000e+00> : vector<8x32xf32>
    %9 = tpu.matmul %3, %8, %cst_12 {dimension_numbers = #tpu.dot_dimension_numbers<[1], [0], [0], [1], [0, 0, 1, 1], [], []>} : vector<8x16xf32>, vector<16x32xf32>, vector<8x32xf32> -> vector<8x32xf32>
    %c0_13 = arith.constant 0 : index
    %c0_14 = arith.constant 0 : index
    %10 = vector.load %arg6[%c0_13, %c0_14] : memref<16x32xf32, #tpu.memory_space<vmem>>, vector<16x32xf32>
    %cst_15 = arith.constant dense<0.000000e+00> : vector<8x32xf32>
    %11 = tpu.matmul %5, %10, %cst_15 {dimension_numbers = #tpu.dot_dimension_numbers<[1], [0], [0], [1], [0, 0, 1, 1], [], []>} : vector<8x16xf32>, vector<16x32xf32>, vector<8x32xf32> -> vector<8x32xf32>
    %cst_16 = arith.constant 0.000000e+00 : f32
    %12 = vector.broadcast %cst_16 : f32 to vector<8x32xf32>
    %13 = vector.extract_strided_slice %7 {offsets = [0, 0], sizes = [8, 8], strides = [1, 1]} : vector<8x32xf32> to vector<8x8xf32>
    %14 = vector.extract_strided_slice %9 {offsets = [0, 0], sizes = [8, 8], strides = [1, 1]} : vector<8x32xf32> to vector<8x8xf32>
    %15 = vector.extract_strided_slice %11 {offsets = [0, 0], sizes = [8, 8], strides = [1, 1]} : vector<8x32xf32> to vector<8x8xf32>
    %cst_17 = arith.constant dense<0.000000e+00> : vector<8x8xf32>
    %16 = tpu.matmul %13, %14, %cst_17 {dimension_numbers = #tpu.dot_dimension_numbers<[1], [1], [0], [0], [0, 0, 1, 0], [], []>} : vector<8x8xf32>, vector<8x8xf32>, vector<8x8xf32> -> vector<8x8xf32>
    %cst_18 = arith.constant 0.353553385 : f32
    %17 = vector.broadcast %cst_18 : f32 to vector<8x8xf32>
    %18 = arith.mulf %16, %17 : vector<8x8xf32>
    %cst_19 = arith.constant dense<0xFF800000> : vector<8xf32>
    %19 = vector.multi_reduction <maximumf>, %18, %cst_19 [1] : vector<8x8xf32> to vector<8xf32>
    %20 = vector.shape_cast %19 : vector<8xf32> to vector<8x1xf32>
    %21 = vector.broadcast %20 : vector<8x1xf32> to vector<8x8xf32>
    %22 = arith.subf %18, %21 : vector<8x8xf32>
    %23 = math.exp %22 : vector<8x8xf32>
    %cst_20 = arith.constant dense<0.000000e+00> : vector<8xf32>
    %24 = vector.multi_reduction <add>, %23, %cst_20 [1] : vector<8x8xf32> to vector<8xf32>
    %25 = vector.shape_cast %24 : vector<8xf32> to vector<8x1xf32>
    %26 = tpu.reciprocal %25 : vector<8x1xf32> -> vector<8x1xf32>
    %27 = vector.broadcast %26 : vector<8x1xf32> to vector<8x8xf32>
    %28 = arith.mulf %23, %27 : vector<8x8xf32>
    %cst_21 = arith.constant dense<0.000000e+00> : vector<8x8xf32>
    %29 = tpu.matmul %28, %15, %cst_21 {dimension_numbers = #tpu.dot_dimension_numbers<[1], [0], [0], [1], [0, 0, 1, 1], [], []>} : vector<8x8xf32>, vector<8x8xf32>, vector<8x8xf32> -> vector<8x8xf32>
    %c0_22 = arith.constant 0 : index
    %c0_23 = arith.constant 0 : index
    %30 = vector.load %arg7[%c0_22, %c0_23] : memref<32x32xf32, #tpu.memory_space<vmem>>, vector<8x32xf32>
    %cst_24 = arith.constant dense<0.000000e+00> : vector<8x32xf32>
    %31 = tpu.matmul %29, %30, %cst_24 {dimension_numbers = #tpu.dot_dimension_numbers<[1], [0], [0], [1], [0, 0, 1, 1], [], []>} : vector<8x8xf32>, vector<8x32xf32>, vector<8x32xf32> -> vector<8x32xf32>
    %32 = arith.addf %12, %31 : vector<8x32xf32>
    %33 = vector.extract_strided_slice %7 {offsets = [0, 8], sizes = [8, 8], strides = [1, 1]} : vector<8x32xf32> to vector<8x8xf32>
    %34 = vector.extract_strided_slice %9 {offsets = [0, 8], sizes = [8, 8], strides = [1, 1]} : vector<8x32xf32> to vector<8x8xf32>
    %35 = vector.extract_strided_slice %11 {offsets = [0, 8], sizes = [8, 8], strides = [1, 1]} : vector<8x32xf32> to vector<8x8xf32>
    %cst_25 = arith.constant dense<0.000000e+00> : vector<8x8xf32>
    %36 = tpu.matmul %33, %34, %cst_25 {dimension_numbers = #tpu.dot_dimension_numbers<[1], [1], [0], [0], [0, 0, 1, 0], [], []>} : vector<8x8xf32>, vector<8x8xf32>, vector<8x8xf32> -> vector<8x8xf32>
    %cst_26 = arith.constant 0.353553385 : f32
    %37 = vector.broadcast %cst_26 : f32 to vector<8x8xf32>
    %38 = arith.mulf %36, %37 : vector<8x8xf32>
    %cst_27 = arith.constant dense<0xFF800000> : vector<8xf32>
    %39 = vector.multi_reduction <maximumf>, %38, %cst_27 [1] : vector<8x8xf32> to vector<8xf32>
    %40 = vector.shape_cast %39 : vector<8xf32> to vector<8x1xf32>
    %41 = vector.broadcast %40 : vector<8x1xf32> to vector<8x8xf32>
    %42 = arith.subf %38, %41 : vector<8x8xf32>
    %43 = math.exp %42 : vector<8x8xf32>
    %cst_28 = arith.constant dense<0.000000e+00> : vector<8xf32>
    %44 = vector.multi_reduction <add>, %43, %cst_28 [1] : vector<8x8xf32> to vector<8xf32>
    %45 = vector.shape_cast %44 : vector<8xf32> to vector<8x1xf32>
    %46 = tpu.reciprocal %45 : vector<8x1xf32> -> vector<8x1xf32>
    %47 = vector.broadcast %46 : vector<8x1xf32> to vector<8x8xf32>
    %48 = arith.mulf %43, %47 : vector<8x8xf32>
    %cst_29 = arith.constant dense<0.000000e+00> : vector<8x8xf32>
    %49 = tpu.matmul %48, %35, %cst_29 {dimension_numbers = #tpu.dot_dimension_numbers<[1], [0], [0], [1], [0, 0, 1, 1], [], []>} : vector<8x8xf32>, vector<8x8xf32>, vector<8x8xf32> -> vector<8x8xf32>
    %c8 = arith.constant 8 : index
    %c0_30 = arith.constant 0 : index
    %50 = vector.load %arg7[%c8, %c0_30] : memref<32x32xf32, #tpu.memory_space<vmem>>, vector<8x32xf32>
    %cst_31 = arith.constant dense<0.000000e+00> : vector<8x32xf32>
    %51 = tpu.matmul %49, %50, %cst_31 {dimension_numbers = #tpu.dot_dimension_numbers<[1], [0], [0], [1], [0, 0, 1, 1], [], []>} : vector<8x8xf32>, vector<8x32xf32>, vector<8x32xf32> -> vector<8x32xf32>
    %52 = arith.addf %32, %51 : vector<8x32xf32>
    %53 = vector.extract_strided_slice %7 {offsets = [0, 16], sizes = [8, 8], strides = [1, 1]} : vector<8x32xf32> to vector<8x8xf32>
    %54 = vector.extract_strided_slice %9 {offsets = [0, 16], sizes = [8, 8], strides = [1, 1]} : vector<8x32xf32> to vector<8x8xf32>
    %55 = vector.extract_strided_slice %11 {offsets = [0, 16], sizes = [8, 8], strides = [1, 1]} : vector<8x32xf32> to vector<8x8xf32>
    %cst_32 = arith.constant dense<0.000000e+00> : vector<8x8xf32>
    %56 = tpu.matmul %53, %54, %cst_32 {dimension_numbers = #tpu.dot_dimension_numbers<[1], [1], [0], [0], [0, 0, 1, 0], [], []>} : vector<8x8xf32>, vector<8x8xf32>, vector<8x8xf32> -> vector<8x8xf32>
    %cst_33 = arith.constant 0.353553385 : f32
    %57 = vector.broadcast %cst_33 : f32 to vector<8x8xf32>
    %58 = arith.mulf %56, %57 : vector<8x8xf32>
    %cst_34 = arith.constant dense<0xFF800000> : vector<8xf32>
    %59 = vector.multi_reduction <maximumf>, %58, %cst_34 [1] : vector<8x8xf32> to vector<8xf32>
    %60 = vector.shape_cast %59 : vector<8xf32> to vector<8x1xf32>
    %61 = vector.broadcast %60 : vector<8x1xf32> to vector<8x8xf32>
    %62 = arith.subf %58, %61 : vector<8x8xf32>
    %63 = math.exp %62 : vector<8x8xf32>
    %cst_35 = arith.constant dense<0.000000e+00> : vector<8xf32>
    %64 = vector.multi_reduction <add>, %63, %cst_35 [1] : vector<8x8xf32> to vector<8xf32>
    %65 = vector.shape_cast %64 : vector<8xf32> to vector<8x1xf32>
    %66 = tpu.reciprocal %65 : vector<8x1xf32> -> vector<8x1xf32>
    %67 = vector.broadcast %66 : vector<8x1xf32> to vector<8x8xf32>
    %68 = arith.mulf %63, %67 : vector<8x8xf32>
    %cst_36 = arith.constant dense<0.000000e+00> : vector<8x8xf32>
    %69 = tpu.matmul %68, %55, %cst_36 {dimension_numbers = #tpu.dot_dimension_numbers<[1], [0], [0], [1], [0, 0, 1, 1], [], []>} : vector<8x8xf32>, vector<8x8xf32>, vector<8x8xf32> -> vector<8x8xf32>
    %c16 = arith.constant 16 : index
    %c0_37 = arith.constant 0 : index
    %70 = vector.load %arg7[%c16, %c0_37] : memref<32x32xf32, #tpu.memory_space<vmem>>, vector<8x32xf32>
    %cst_38 = arith.constant dense<0.000000e+00> : vector<8x32xf32>
    %71 = tpu.matmul %69, %70, %cst_38 {dimension_numbers = #tpu.dot_dimension_numbers<[1], [0], [0], [1], [0, 0, 1, 1], [], []>} : vector<8x8xf32>, vector<8x32xf32>, vector<8x32xf32> -> vector<8x32xf32>
    %72 = arith.addf %52, %71 : vector<8x32xf32>
    %73 = vector.extract_strided_slice %7 {offsets = [0, 24], sizes = [8, 8], strides = [1, 1]} : vector<8x32xf32> to vector<8x8xf32>
    %74 = vector.extract_strided_slice %9 {offsets = [0, 24], sizes = [8, 8], strides = [1, 1]} : vector<8x32xf32> to vector<8x8xf32>
    %75 = vector.extract_strided_slice %11 {offsets = [0, 24], sizes = [8, 8], strides = [1, 1]} : vector<8x32xf32> to vector<8x8xf32>
    %cst_39 = arith.constant dense<0.000000e+00> : vector<8x8xf32>
    %76 = tpu.matmul %73, %74, %cst_39 {dimension_numbers = #tpu.dot_dimension_numbers<[1], [1], [0], [0], [0, 0, 1, 0], [], []>} : vector<8x8xf32>, vector<8x8xf32>, vector<8x8xf32> -> vector<8x8xf32>
    %cst_40 = arith.constant 0.353553385 : f32
    %77 = vector.broadcast %cst_40 : f32 to vector<8x8xf32>
    %78 = arith.mulf %76, %77 : vector<8x8xf32>
    %cst_41 = arith.constant dense<0xFF800000> : vector<8xf32>
    %79 = vector.multi_reduction <maximumf>, %78, %cst_41 [1] : vector<8x8xf32> to vector<8xf32>
    %80 = vector.shape_cast %79 : vector<8xf32> to vector<8x1xf32>
    %81 = vector.broadcast %80 : vector<8x1xf32> to vector<8x8xf32>
    %82 = arith.subf %78, %81 : vector<8x8xf32>
    %83 = math.exp %82 : vector<8x8xf32>
    %cst_42 = arith.constant dense<0.000000e+00> : vector<8xf32>
    %84 = vector.multi_reduction <add>, %83, %cst_42 [1] : vector<8x8xf32> to vector<8xf32>
    %85 = vector.shape_cast %84 : vector<8xf32> to vector<8x1xf32>
    %86 = tpu.reciprocal %85 : vector<8x1xf32> -> vector<8x1xf32>
    %87 = vector.broadcast %86 : vector<8x1xf32> to vector<8x8xf32>
    %88 = arith.mulf %83, %87 : vector<8x8xf32>
    %cst_43 = arith.constant dense<0.000000e+00> : vector<8x8xf32>
    %89 = tpu.matmul %88, %75, %cst_43 {dimension_numbers = #tpu.dot_dimension_numbers<[1], [0], [0], [1], [0, 0, 1, 1], [], []>} : vector<8x8xf32>, vector<8x8xf32>, vector<8x8xf32> -> vector<8x8xf32>
    %c24 = arith.constant 24 : index
    %c0_44 = arith.constant 0 : index
    %90 = vector.load %arg7[%c24, %c0_44] : memref<32x32xf32, #tpu.memory_space<vmem>>, vector<8x32xf32>
    %cst_45 = arith.constant dense<0.000000e+00> : vector<8x32xf32>
    %91 = tpu.matmul %89, %90, %cst_45 {dimension_numbers = #tpu.dot_dimension_numbers<[1], [0], [0], [1], [0, 0, 1, 1], [], []>} : vector<8x8xf32>, vector<8x32xf32>, vector<8x32xf32> -> vector<8x32xf32>
    %92 = arith.addf %72, %91 : vector<8x32xf32>
    %c0_46 = arith.constant 0 : index
    %c0_47 = arith.constant 0 : index
    %c0_48 = arith.constant 0 : index
    %93 = vector.load %arg8[%c0_46, %c0_47, %c0_48] : memref<1x8x32xf32, #tpu.memory_space<vmem>>, vector<1x8x32xf32>
    %94 = vector.shape_cast %93 : vector<1x8x32xf32> to vector<8x32xf32>
    %95 = vector.shape_cast %92 : vector<8x32xf32> to vector<1x8x32xf32>
    tpu.vector_store %arg8[%c0_46, %c0_47, %c0_48], %95 {strides = array<i32>} : memref<1x8x32xf32, #tpu.memory_space<vmem>>, vector<1x8x32xf32>,
    return
  }
  func.func @transform_0(%arg0: i32) -> (i32, i32, i32) {
    %c0_i32 = arith.constant 0 : i32
    %c0_i32_0 = arith.constant 0 : i32
    %c0_i32_1 = arith.constant 0 : i32
    return %arg0, %c0_i32, %c0_i32_0 : i32, i32, i32
  }
  func.func @transform_1(%arg0: i32) -> (i32, i32, i32) {
    %c0_i32 = arith.constant 0 : i32
    %c0_i32_0 = arith.constant 0 : i32
    %c0_i32_1 = arith.constant 0 : i32
    return %arg0, %c0_i32, %c0_i32_0 : i32, i32, i32
  }
  func.func @transform_2(%arg0: i32) -> (i32, i32, i32) {
    %c0_i32 = arith.constant 0 : i32
    %c0_i32_0 = arith.constant 0 : i32
    %c0_i32_1 = arith.constant 0 : i32
    return %arg0, %c0_i32, %c0_i32_0 : i32, i32, i32
  }
  func.func @transform_3(%arg0: i32) -> (i32, i32) {
    %c0_i32 = arith.constant 0 : i32
    %c0_i32_0 = arith.constant 0 : i32
    %c0_i32_1 = arith.constant 0 : i32
    return %c0_i32, %c0_i32_0 : i32, i32
  }
  func.func @transform_4(%arg0: i32) -> (i32, i32) {
    %c0_i32 = arith.constant 0 : i32
    %c0_i32_0 = arith.constant 0 : i32
    %c0_i32_1 = arith.constant 0 : i32
    return %c0_i32, %c0_i32_0 : i32, i32
  }
  func.func @transform_5(%arg0: i32) -> (i32, i32) {
    %c0_i32 = arith.constant 0 : i32
    %c0_i32_0 = arith.constant 0 : i32
    %c0_i32_1 = arith.constant 0 : i32
    return %c0_i32, %c0_i32_0 : i32, i32
  }
  func.func @transform_6(%arg0: i32) -> (i32, i32) {
    %c0_i32 = arith.constant 0 : i32
    %c0_i32_0 = arith.constant 0 : i32
    %c0_i32_1 = arith.constant 0 : i32
    return %c0_i32, %c0_i32_0 : i32, i32
  }
  func.func @transform_7(%arg0: i32) -> (i32, i32, i32) {
    %c0_i32 = arith.constant 0 : i32
    %c0_i32_0 = arith.constant 0 : i32
    %c0_i32_1 = arith.constant 0 : i32
    return %arg0, %c0_i32, %c0_i32_0 : i32, i32, i32
  }
}

</mosaic_0001>

<llo_original>
// kernel: tpu_custom_call.1
$region0: #{tpu_custom_call.1}
  #allocation0 [shape = 'u32[]', space=smem, size = 0x4, offset = 0x4, fixed_abs, tag = 'smem constant byte address 0x4 - core index']
  #allocation1 [shape = 'u32[144,128]{1,0:T(1,128)}', space=vmem, size = 0x12000, scoped, tag = 'internal scratch']
  %s0 = inlined_call_operand.hbm [shape: f32[2,8,16], index: 0, kind: input, shape index: {}]
  %s1 = inlined_call_operand.hbm [shape: f32[2,8,16], index: 1, kind: input, shape index: {}]
  %s2 = inlined_call_operand.hbm [shape: f32[2,8,16], index: 2, kind: input, shape index: {}]
  %s3 = inlined_call_operand.hbm [shape: f32[16,32], index: 3, kind: input, shape index: {}]
  %s4 = inlined_call_operand.hbm [shape: f32[16,32], index: 4, kind: input, shape index: {}]
  %s5 = inlined_call_operand.vmem [shape: f32[16,32], index: 5, kind: input, shape index: {}]
  %s6 = inlined_call_operand.hbm [shape: f32[32,32], index: 6, kind: input, shape index: {}]
  %s7 = inlined_call_operand.hbm [shape: f32[2,8,32], index: 7, kind: output, shape index: {}]
  %s8 = sld [smem:[#allocation0]]
  $region85: #{tpu_custom_call.1} parent=0
    _
  %s10 = ssub.s32 1, %s8
  %s11 = scalar_select 0, %s10, %s8
  $region1: #{tpu_custom_call.1} parent=0
    #allocation2 [shape = 'u8[8192]{0}', space=vmem, size = 0x2000, scoped, tag = 'input window, operand 0']
    #allocation3 [shape = 's32[2]{0}', space=sflag, size = 0x8, scoped, tag = 'scoped memory for tpu_custom_call.1']
    #allocation4 [shape = 's32[2]{0}', space=sflag, size = 0x8, scoped, tag = 'scoped memory for tpu_custom_call.1']
    #allocation5 [shape = 'u8[8192]{0}', space=vmem, size = 0x2000, scoped, tag = 'input window, operand 1']
    #allocation6 [shape = 's32[2]{0}', space=sflag, size = 0x8, scoped, tag = 'scoped memory for tpu_custom_call.1']
    #allocation7 [shape = 'u8[8192]{0}', space=vmem, size = 0x2000, scoped, tag = 'input window, operand 2']
    #allocation8 [shape = 'u8[8192]{0}', space=vmem, size = 0x2000, scoped, tag = 'input window, operand 3, single buffered']
    #allocation9 [shape = 's32[1]{0}', space=sflag, size = 0x4, scoped, tag = 'scoped memory for tpu_custom_call.1']
    #allocation10 [shape = 'u8[8192]{0}', space=vmem, size = 0x2000, scoped, tag = 'input window, operand 4, single buffered']
    #allocation11 [shape = 'u8[16384]{0}', space=vmem, size = 0x4000, scoped, tag = 'input window, operand 6, single buffered']
    #allocation12 [shape = 's32[1]{0}', space=sflag, size = 0x4, scoped, tag = 'scoped memory for tpu_custom_call.1']
    #allocation13 [shape = 'u8[8192]{0}', space=vmem, size = 0x2000, scoped, tag = 'output window, operand 0']
    %12 = vsyncpa [#allocation3], 0
    %s13 = scalar_lea.sflag [#allocation3], 1
    %14 = vsyncpa %s13, 0
    %15 = vsyncpa [#allocation6], 0
    %s16 = scalar_lea.sflag [#allocation6], 1
    %17 = vsyncpa %s16, 0
    %18 = vsyncpa [#allocation9], 0
    %19 = vsyncpa [#allocation12], 0
    %20 = vsyncpa [#allocation4], 0
    %s21 = scalar_lea.sflag [#allocation4], 1
    %22 = vsyncpa %s21, 0
    loop: start=0, step=1, limit=4
    $region2: #{tpu_custom_call.1} parent=1 // loop_pre_header
      _
    $region3: #{tpu_custom_call.1} parent=1 // loop_header
      %s24 = sphi 0, %s28
      %p25 = scmp.ge.s32.totalorder %s24, 4
      %s34 = sphi 0, %s36
      %s37 = sphi 0, %s34
      %s38 = sphi 0, %s37
      %s54 = sphi 0, %s38
      %s60 = sphi 0, %s62
      %s63 = sphi 0, %s60
      %s64 = sphi 0, %s63
      %s80 = sphi 0, %s64
      %s86 = sphi 0, %s88
      %s89 = sphi 0, %s86
      %s90 = sphi 0, %s89
      %s106 = sphi 0, %s90
      %s110 = sphi 0, %s110
      %s112 = sphi 0, %s110
      %s113 = sphi 0, %s112
      %s127 = sphi 0, %s113
      %s131 = sphi 0, %s131
      %s133 = sphi 0, %s131
      %s134 = sphi 0, %s133
      %s148 = sphi 0, %s134
      %s152 = sphi 0, %s152
      %s154 = sphi 0, %s152
      %s155 = sphi 0, %s154
      %s169 = sphi 0, %s155
      %s173 = sphi 0, %s173
      %s175 = sphi 0, %s173
      %s176 = sphi 0, %s175
      %s190 = sphi 0, %s176
      %s196 = sphi 0, %s198
      %s199 = sphi 0, %s196
      %s200 = sphi 0, %s199
      %s216 = sphi 0, %s200
    $region4: #{tpu_custom_call.1} parent=1 // loop_header_branch
      %27 = sbr.rel (%p25) target = $region8
    $region5: #{tpu_custom_call.1} parent=1 // loop_body
      %s29 = ssub.s32 %s24, 1
      %s30 = ssub.s32 %s24, 2
      %s31 = sadd.s32 %s24, 1
      %s32 = ssub.s32 %s24, %s31
      %p33 = scmp.eq.s32.totalorder %s32, 0
      %s35 = sadd.s32 %s34, 1
      %s36 = scalar_select %p33, %s34, %s35
      %p39 = pneg %p33
      %p40 = scmp.eq.s32.totalorder %s24, 1
      %p41 = por %p39, %p40
      %p42 = scmp.ne.s32.totalorder %s34, %s37
      %p43 = scmp.eq.s32.totalorder %s24, 0
      %p44 = por %p42, %p43
      %p45 = scmp.ne.s32.totalorder %s34, %s37
      %p46 = scmp.eq.s32.totalorder %s29, 1
      %p47 = por %p45, %p46
      %p48 = scmp.ne.s32.totalorder %s37, %s38
      %p49 = scmp.eq.s32.totalorder %s29, 0
      %p50 = por %p48, %p49
      %p51 = scmp.ne.s32.totalorder %s37, %s38
      %p52 = scmp.eq.s32.totalorder %s30, 1
      %p53 = por %p51, %p52
      %p55 = scmp.ne.s32.totalorder %s38, %s54
      %p56 = scmp.eq.s32.totalorder %s30, 0
      %p57 = por %p55, %p56
      %s58 = ssub.s32 %s24, %s31
      %p59 = scmp.eq.s32.totalorder %s58, 0
      %s61 = sadd.s32 %s60, 1
      %s62 = scalar_select %p59, %s60, %s61
      %p65 = pneg %p59
      %p66 = scmp.eq.s32.totalorder %s24, 1
      %p67 = por %p65, %p66
      %p68 = scmp.ne.s32.totalorder %s60, %s63
      %p69 = scmp.eq.s32.totalorder %s24, 0
      %p70 = por %p68, %p69
      %p71 = scmp.ne.s32.totalorder %s60, %s63
      %p72 = scmp.eq.s32.totalorder %s29, 1
      %p73 = por %p71, %p72
      %p74 = scmp.ne.s32.totalorder %s63, %s64
      %p75 = scmp.eq.s32.totalorder %s29, 0
      %p76 = por %p74, %p75
      %p77 = scmp.ne.s32.totalorder %s63, %s64
      %p78 = scmp.eq.s32.totalorder %s30, 1
      %p79 = por %p77, %p78
      %p81 = scmp.ne.s32.totalorder %s64, %s80
      %p82 = scmp.eq.s32.totalorder %s30, 0
      %p83 = por %p81, %p82
      %s84 = ssub.s32 %s24, %s31
      %p85 = scmp.eq.s32.totalorder %s84, 0
      %s87 = sadd.s32 %s86, 1
      %s88 = scalar_select %p85, %s86, %s87
      %p91 = pneg %p85
      %p92 = scmp.eq.s32.totalorder %s24, 1
      %p93 = por %p91, %p92
      %p94 = scmp.ne.s32.totalorder %s86, %s89
      %p95 = scmp.eq.s32.totalorder %s24, 0
      %p96 = por %p94, %p95
      %p97 = scmp.ne.s32.totalorder %s86, %s89
      %p98 = scmp.eq.s32.totalorder %s29, 1
      %p99 = por %p97, %p98
      %p100 = scmp.ne.s32.totalorder %s89, %s90
      %p101 = scmp.eq.s32.totalorder %s29, 0
      %p102 = por %p100, %p101
      %p103 = scmp.ne.s32.totalorder %s89, %s90
      %p104 = scmp.eq.s32.totalorder %s30, 1
      %p105 = por %p103, %p104
      %p107 = scmp.ne.s32.totalorder %s90, %s106
      %p108 = scmp.eq.s32.totalorder %s30, 0
      %p109 = por %p107, %p108
      %s111 = sadd.s32 %s110, 1
      %p114 = scmp.eq.s32.totalorder %s24, 1
      %p115 = scmp.ne.s32.totalorder %s110, %s112
      %p116 = scmp.eq.s32.totalorder %s24, 0
      %p117 = por %p115, %p116
      %p118 = scmp.ne.s32.totalorder %s110, %s112
      %p119 = scmp.eq.s32.totalorder %s29, 1
      %p120 = por %p118, %p119
      %p121 = scmp.ne.s32.totalorder %s112, %s113
      %p122 = scmp.eq.s32.totalorder %s29, 0
      %p123 = por %p121, %p122
      %p124 = scmp.ne.s32.totalorder %s112, %s113
      %p125 = scmp.eq.s32.totalorder %s30, 1
      %p126 = por %p124, %p125
      %p128 = scmp.ne.s32.totalorder %s113, %s127
      %p129 = scmp.eq.s32.totalorder %s30, 0
      %p130 = por %p128, %p129
      %s132 = sadd.s32 %s131, 1
      %p135 = scmp.eq.s32.totalorder %s24, 1
      %p136 = scmp.ne.s32.totalorder %s131, %s133
      %p137 = scmp.eq.s32.totalorder %s24, 0
      %p138 = por %p136, %p137
      %p139 = scmp.ne.s32.totalorder %s131, %s133
      %p140 = scmp.eq.s32.totalorder %s29, 1
      %p141 = por %p139, %p140
      %p142 = scmp.ne.s32.totalorder %s133, %s134
      %p143 = scmp.eq.s32.totalorder %s29, 0
      %p144 = por %p142, %p143
      %p145 = scmp.ne.s32.totalorder %s133, %s134
      %p146 = scmp.eq.s32.totalorder %s30, 1
      %p147 = por %p145, %p146
      %p149 = scmp.ne.s32.totalorder %s134, %s148
      %p150 = scmp.eq.s32.totalorder %s30, 0
      %p151 = por %p149, %p150
      %s153 = sadd.s32 %s152, 1
      %p156 = scmp.eq.s32.totalorder %s24, 1
      %p157 = scmp.ne.s32.totalorder %s152, %s154
      %p158 = scmp.eq.s32.totalorder %s24, 0
      %p159 = por %p157, %p158
      %p160 = scmp.ne.s32.totalorder %s152, %s154
      %p161 = scmp.eq.s32.totalorder %s29, 1
      %p162 = por %p160, %p161
      %p163 = scmp.ne.s32.totalorder %s154, %s155
      %p164 = scmp.eq.s32.totalorder %s29, 0
      %p165 = por %p163, %p164
      %p166 = scmp.ne.s32.totalorder %s154, %s155
      %p167 = scmp.eq.s32.totalorder %s30, 1
      %p168 = por %p166, %p167
      %p170 = scmp.ne.s32.totalorder %s155, %s169
      %p171 = scmp.eq.s32.totalorder %s30, 0
      %p172 = por %p170, %p171
      %s174 = sadd.s32 %s173, 1
      %p177 = scmp.eq.s32.totalorder %s24, 1
      %p178 = scmp.ne.s32.totalorder %s173, %s175
      %p179 = scmp.eq.s32.totalorder %s24, 0
      %p180 = por %p178, %p179
      %p181 = scmp.ne.s32.totalorder %s173, %s175
      %p182 = scmp.eq.s32.totalorder %s29, 1
      %p183 = por %p181, %p182
      %p184 = scmp.ne.s32.totalorder %s175, %s176
      %p185 = scmp.eq.s32.totalorder %s29, 0
      %p186 = por %p184, %p185
      %p187 = scmp.ne.s32.totalorder %s175, %s176
      %p188 = scmp.eq.s32.totalorder %s30, 1
      %p189 = por %p187, %p188
      %p191 = scmp.ne.s32.totalorder %s176, %s190
      %p192 = scmp.eq.s32.totalorder %s30, 0
      %p193 = por %p191, %p192
      %s194 = ssub.s32 %s24, %s31
      %p195 = scmp.eq.s32.totalorder %s194, 0
      %s197 = sadd.s32 %s196, 1
      %s198 = scalar_select %p195, %s196, %s197
      %p201 = pneg %p195
      %p202 = scmp.eq.s32.totalorder %s24, 1
      %p203 = por %p201, %p202
      %p204 = scmp.ne.s32.totalorder %s196, %s199
      %p205 = scmp.eq.s32.totalorder %s24, 0
      %p206 = por %p204, %p205
      %p207 = scmp.ne.s32.totalorder %s196, %s199
      %p208 = scmp.eq.s32.totalorder %s29, 1
      %p209 = por %p207, %p208
      %p210 = scmp.ne.s32.totalorder %s199, %s200
      %p211 = scmp.eq.s32.totalorder %s29, 0
      %p212 = por %p210, %p211
      %p213 = scmp.ne.s32.totalorder %s199, %s200
      %p214 = scmp.eq.s32.totalorder %s30, 1
      %p215 = por %p213, %p214
      %p217 = scmp.ne.s32.totalorder %s200, %s216
      %p218 = scmp.eq.s32.totalorder %s30, 0
      %p219 = por %p217, %p218
      %p220 = scmp.le.s32.totalorder 1, %s24
      %p221 = scmp.lt.s32.totalorder %s24, 3
      %p222 = pnand %p220, %p221
      %p223 = pneg %p222
      // Predicated region
      $region9: #{tpu_custom_call.1} parent=5 // pred_check
        _
      $region10: #{tpu_custom_call.1} parent=5 // pred_check_branch
        %225 = sbr.rel (%p222) target = $region12
      $region11: #{tpu_custom_call.1} parent=5 // pred_region
        %s226 = ssub.s32 %s24, 1
        // Predicated region
        $region13: #{tpu_custom_call.1} parent=11 // pred_check
          %p227 = pneg %p123
        $region14: #{tpu_custom_call.1} parent=11 // pred_check_branch
          %229 = sbr.rel (%p227) target = $region16
        $region15: #{tpu_custom_call.1} parent=11 // pred_region
          %s231 = ssub.s32 256, 256
          %232 = vsyncadd [#allocation9], %s231
          %s233 = sshll.u32 [#allocation8], 4
          %s234 = int_to_ptr.vmem [resolvable:$true] %s233
          %239 = dma.hbm_to_vmem [thread:$0]  %s3, 256, %s234, [#allocation9], 128, 128, 8
        $region16: #{tpu_custom_call.1} parent=11 // pred_fallthru
          _
        // Predicated region
        $region17: #{tpu_custom_call.1} parent=11 // pred_check
          %p240 = pneg %p144
        $region18: #{tpu_custom_call.1} parent=11 // pred_check_branch
          %242 = sbr.rel (%p240) target = $region20
        $region19: #{tpu_custom_call.1} parent=11 // pred_region
          %s244 = ssub.s32 256, 256
          %245 = vsyncadd [#allocation9], %s244
          %s246 = sshll.u32 [#allocation10], 4
          %s247 = int_to_ptr.vmem [resolvable:$true] %s246
          %252 = dma.hbm_to_vmem [thread:$0]  %s4, 256, %s247, [#allocation9], 128, 128, 8
        $region20: #{tpu_custom_call.1} parent=11 // pred_fallthru
          _
        // Predicated region
        $region21: #{tpu_custom_call.1} parent=11 // pred_check
          %p253 = pneg %p165
        $region22: #{tpu_custom_call.1} parent=11 // pred_check_branch
          %255 = sbr.rel (%p253) target = $region24
        $region23: #{tpu_custom_call.1} parent=11 // pred_region
          _
        $region24: #{tpu_custom_call.1} parent=11 // pred_fallthru
          _
        // Predicated region
        $region25: #{tpu_custom_call.1} parent=11 // pred_check
          %p256 = pneg %p186
        $region26: #{tpu_custom_call.1} parent=11 // pred_check_branch
          %258 = sbr.rel (%p256) target = $region28
        $region27: #{tpu_custom_call.1} parent=11 // pred_region
          %s260 = ssub.s32 512, 512
          %261 = vsyncadd [#allocation12], %s260
          %s262 = sshll.u32 [#allocation11], 4
          %s263 = int_to_ptr.vmem [resolvable:$true] %s262
          %268 = dma.hbm_to_vmem [thread:$0]  %s6, 512, %s263, [#allocation12], 128, 128, 8
        $region28: #{tpu_custom_call.1} parent=11 // pred_fallthru
          _
      $region12: #{tpu_custom_call.1} parent=5 // pred_fallthru
        _
      %p269 = scmp.lt.s32.totalorder %s24, 2
      // Predicated region
      $region29: #{tpu_custom_call.1} parent=5 // pred_check
        %p270 = pneg %p269
      $region30: #{tpu_custom_call.1} parent=5 // pred_check_branch
        %272 = sbr.rel (%p270) target = $region32
      $region31: #{tpu_custom_call.1} parent=5 // pred_region
        // Predicated region
        $region33: #{tpu_custom_call.1} parent=31 // pred_check
          %p273 = pneg %p44
        $region34: #{tpu_custom_call.1} parent=31 // pred_check_branch
          %275 = sbr.rel (%p273) target = $region36
        $region35: #{tpu_custom_call.1} parent=31 // pred_region
          %s276 = sand.u32 %s34, 1
          %s277 = scalar_lea.sflag [#allocation3], %s276
          %s278 = sand.u32 %s34, 1
          %s279 = smul.addr %s278, 8
          %s280 = scalar_lea.vmem [#allocation2], %s279
          %s282 = ssub.s32 128, 128
          %283 = vsyncadd %s277, %s282
          %s284 = smul.addr %s24, 128
          %s285 = scalar_lea.hbm %s0, %s284
          %s287 = sshll.u32 %s280, 4
          %s288 = int_to_ptr.vmem [resolvable:$true] %s287
          %290 = dma.hbm_to_vmem [thread:$0]  %s285, 128, %s288, %s277
        $region36: #{tpu_custom_call.1} parent=31 // pred_fallthru
          _
        // Predicated region
        $region37: #{tpu_custom_call.1} parent=31 // pred_check
          %p291 = pneg %p70
        $region38: #{tpu_custom_call.1} parent=31 // pred_check_branch
          %293 = sbr.rel (%p291) target = $region40
        $region39: #{tpu_custom_call.1} parent=31 // pred_region
          %s294 = sand.u32 %s24, 1
          %s295 = scalar_lea.sflag [#allocation6], %s294
          %s296 = sand.u32 %s60, 1
          %s297 = smul.addr %s296, 8
          %s298 = scalar_lea.vmem [#allocation5], %s297
          %s300 = ssub.s32 128, 128
          %301 = vsyncadd %s295, %s300
          %s302 = smul.addr %s24, 128
          %s303 = scalar_lea.hbm %s1, %s302
          %s305 = sshll.u32 %s298, 4
          %s306 = int_to_ptr.vmem [resolvable:$true] %s305
          %308 = dma.hbm_to_vmem [thread:$0]  %s303, 128, %s306, %s295
        $region40: #{tpu_custom_call.1} parent=31 // pred_fallthru
          _
        // Predicated region
        $region41: #{tpu_custom_call.1} parent=31 // pred_check
          %p309 = pneg %p96
        $region42: #{tpu_custom_call.1} parent=31 // pred_check_branch
          %311 = sbr.rel (%p309) target = $region44
        $region43: #{tpu_custom_call.1} parent=31 // pred_region
          %s312 = sand.u32 %s24, 1
          %s313 = scalar_lea.sflag [#allocation6], %s312
          %s314 = sand.u32 %s86, 1
          %s315 = smul.addr %s314, 8
          %s316 = scalar_lea.vmem [#allocation7], %s315
          %s318 = ssub.s32 128, 128
          %319 = vsyncadd %s313, %s318
          %s320 = smul.addr %s24, 128
          %s321 = scalar_lea.hbm %s2, %s320
          %s323 = sshll.u32 %s316, 4
          %s324 = int_to_ptr.vmem [resolvable:$true] %s323
          %326 = dma.hbm_to_vmem [thread:$0]  %s321, 128, %s324, %s313
        $region44: #{tpu_custom_call.1} parent=31 // pred_fallthru
          _
      $region32: #{tpu_custom_call.1} parent=5 // pred_fallthru
        _
      %p327 = scmp.le.s32.totalorder 1, %s24
      %p328 = scmp.lt.s32.totalorder %s24, 3
      %p329 = pnand %p327, %p328
      %p330 = pneg %p329
      // Predicated region
      $region45: #{tpu_custom_call.1} parent=5 // pred_check
        _
      $region46: #{tpu_custom_call.1} parent=5 // pred_check_branch
        %332 = sbr.rel (%p329) target = $region48
      $region47: #{tpu_custom_call.1} parent=5 // pred_region
        %s333 = ssub.s32 %s24, 1
        %s334 = sand.u32 %s37, 1
        %s335 = scalar_lea.sflag [#allocation3], %s334
        %s336 = sand.u32 %s37, 1
        %s337 = smul.addr %s336, 8
        %s338 = scalar_lea.vmem [#allocation2], %s337
        // Predicated region
        $region49: #{tpu_custom_call.1} parent=47 // pred_check
          %p339 = pneg %p50
        $region50: #{tpu_custom_call.1} parent=47 // pred_check_branch
          %341 = sbr.rel (%p339) target = $region52
        $region51: #{tpu_custom_call.1} parent=47 // pred_region
          %342 = dma.done %s335, 128
        $region52: #{tpu_custom_call.1} parent=47 // pred_fallthru
          _
        %s343 = sand.u32 %s29, 1
        %s344 = scalar_lea.sflag [#allocation6], %s343
        %s345 = sand.u32 %s63, 1
        %s346 = smul.addr %s345, 8
        %s347 = scalar_lea.vmem [#allocation5], %s346
        // Predicated region
        $region53: #{tpu_custom_call.1} parent=47 // pred_check
          %p348 = pneg %p76
        $region54: #{tpu_custom_call.1} parent=47 // pred_check_branch
          %350 = sbr.rel (%p348) target = $region56
        $region55: #{tpu_custom_call.1} parent=47 // pred_region
          %351 = dma.done %s344, 128
        $region56: #{tpu_custom_call.1} parent=47 // pred_fallthru
          _
        %s352 = sand.u32 %s29, 1
        %s353 = scalar_lea.sflag [#allocation6], %s352
        %s354 = sand.u32 %s89, 1
        %s355 = smul.addr %s354, 8
        %s356 = scalar_lea.vmem [#allocation7], %s355
        // Predicated region
        $region57: #{tpu_custom_call.1} parent=47 // pred_check
          %p357 = pneg %p102
        $region58: #{tpu_custom_call.1} parent=47 // pred_check_branch
          %359 = sbr.rel (%p357) target = $region60
        $region59: #{tpu_custom_call.1} parent=47 // pred_region
          %360 = dma.done %s353, 128
        $region60: #{tpu_custom_call.1} parent=47 // pred_fallthru
          _
        // Predicated region
        $region61: #{tpu_custom_call.1} parent=47 // pred_check
          %p361 = pneg %p123
        $region62: #{tpu_custom_call.1} parent=47 // pred_check_branch
          %363 = sbr.rel (%p361) target = $region64
        $region63: #{tpu_custom_call.1} parent=47 // pred_region
          %364 = dma.done [#allocation9], 256
        $region64: #{tpu_custom_call.1} parent=47 // pred_fallthru
          _
        // Predicated region
        $region65: #{tpu_custom_call.1} parent=47 // pred_check
          %p365 = pneg %p144
        $region66: #{tpu_custom_call.1} parent=47 // pred_check_branch
          %367 = sbr.rel (%p365) target = $region68
        $region67: #{tpu_custom_call.1} parent=47 // pred_region
          %368 = dma.done [#allocation9], 256
        $region68: #{tpu_custom_call.1} parent=47 // pred_fallthru
          _
        // Predicated region
        $region69: #{tpu_custom_call.1} parent=47 // pred_check
          %p369 = pneg %p186
        $region70: #{tpu_custom_call.1} parent=47 // pred_check_branch
          %371 = sbr.rel (%p369) target = $region72
        $region71: #{tpu_custom_call.1} parent=47 // pred_region
          %372 = dma.done [#allocation12], 512
        $region72: #{tpu_custom_call.1} parent=47 // pred_fallthru
          _
        %s373 = sand.u32 %s37, 1
        %s374 = scalar_lea.sflag [#allocation3], %s373
        %s375 = sand.u32 %s37, 1
        %s376 = smul.addr %s375, 8
        %s377 = scalar_lea.vmem [#allocation2], %s376
        %p378 = pneg %p50
        %p379 = pneg %p47
        %s380 = sand.u32 %s29, 1
        %s381 = scalar_lea.sflag [#allocation6], %s380
        %s382 = sand.u32 %s63, 1
        %s383 = smul.addr %s382, 8
        %s384 = scalar_lea.vmem [#allocation5], %s383
        %p385 = pneg %p76
        %p386 = pneg %p73
        %s387 = sand.u32 %s29, 1
        %s388 = scalar_lea.sflag [#allocation6], %s387
        %s389 = sand.u32 %s89, 1
        %s390 = smul.addr %s389, 8
        %s391 = scalar_lea.vmem [#allocation7], %s390
        %p392 = pneg %p102
        %p393 = pneg %p99
        %p394 = pneg %p123
        %p395 = pneg %p120
        %p396 = pneg %p144
        %p397 = pneg %p141
        %p398 = pneg %p165
        %p399 = pneg %p162
        %p400 = pneg %p186
        %p401 = pneg %p183
        %p402 = pneg %p212
        %p403 = pneg %p209
        %s404 = sand.u32 %s199, 1
        %s405 = scalar_lea.sflag [#allocation4], %s404
        %s406 = sand.u32 %s199, 1
        %s407 = smul.addr %s406, 8
        %s408 = scalar_lea.vmem [#allocation13], %s407
        %v409 = vld [vmem:[%s338] sm:$0xff]
        %v410 = vld [vmem:[%s347] sm:$0xff]
        %v411 = vld [vmem:[%s356] sm:$0xff]
        %v412 = vld [vmem:[#allocation8] sm:$0xff]
        %v413 = vld [vmem:[#allocation8 + $0x8] sm:$0xff]
        %vm414 = vcmask 130048
        %v416 = vsel %vm414, %v409, 0
        %418 = vmatprep.subr.mxu0 0.0
        %419 = vmatpush1.msra.mxu0 %v412
        %420 = vmatprep.subr.mxu0 0.0
        %421 = vmatpush1.msra.mxu0 %v413
        %422 = vmatprep.subr.mxu0 0.0
        %423 = vmatpush1.msra.mxu0 0.0
        %424 = vmatprep.subr.mxu0 0.0
        %425 = vmatpush1.msra.mxu0 0.0
        %426 = vmatprep.subr.mxu0 0.0
        %427 = vmatpush1.msra.mxu0 0.0
        %428 = vmatprep.subr.mxu0 0.0
        %429 = vmatpush1.msra.mxu0 0.0
        %430 = vmatprep.subr.mxu0 0.0
        %431 = vmatpush1.msra.mxu0 0.0
        %432 = vmatprep.subr.mxu0 0.0
        %433 = vmatpush1.msra.mxu0 0.0
        %434 = vmatprep.subr.mxu0 0.0
        %435 = vmatpush1.msra.mxu0 0.0
        %436 = vmatprep.subr.mxu0 0.0
        %437 = vmatpush1.msra.mxu0 0.0
        %438 = vmatprep.subr.mxu0 0.0
        %439 = vmatpush1.msra.mxu0 0.0
        %440 = vmatprep.subr.mxu0 0.0
        %441 = vmatpush1.msra.mxu0 0.0
        %442 = vmatprep.subr.mxu0 0.0
        %443 = vmatpush1.msra.mxu0 0.0
        %444 = vmatprep.subr.mxu0 0.0
        %445 = vmatpush1.msra.mxu0 0.0
        %446 = vmatprep.subr.mxu0 0.0
        %447 = vmatpush1.msra.mxu0 0.0
        %448 = vmatprep.subr.mxu0 0.0
        %449 = vmatpush1.msra.mxu0 0.0
        %450 = vmatprep.subr.mxu0 0.0
        %451 = vmatpush1.msra.mxu0 0.0
        %452 = vmatprep.subr.mxu0 0.0
        %453 = vmatpush1.msra.mxu0 0.0
        %454 = vmatprep.subr.mxu0 0.0
        %455 = vmatpush1.msra.mxu0 0.0
        %456 = vmatprep.subr.mxu0 0.0
        %457 = vmatpush1.msra.mxu0 0.0
        %458 = vmatprep.subr.mxu0 0.0
        %459 = vmatpush1.msra.mxu0 0.0
        %460 = vmatprep.subr.mxu0 0.0
        %461 = vmatpush1.msra.mxu0 0.0
        %462 = vmatprep.subr.mxu0 0.0
        %463 = vmatpush1.msra.mxu0 0.0
        %464 = vmatprep.subr.mxu0 0.0
        %465 = vmatpush1.msra.mxu0 0.0
        %466 = vmatprep.subr.mxu0 0.0
        %467 = vmatpush1.msra.mxu0 0.0
        %468 = vmatprep.subr.mxu0 0.0
        %469 = vmatpush1.msra.mxu0 0.0
        %470 = vmatprep.subr.mxu0 0.0
        %471 = vmatpush1.msra.mxu0 0.0
        %472 = vmatprep.subr.mxu0 0.0
        %473 = vmatpush1.msra.mxu0 0.0
        %474 = vmatprep.subr.mxu0 0.0
        %475 = vmatpush1.msra.mxu0 0.0
        %476 = vmatprep.subr.mxu0 0.0
        %477 = vmatpush1.msra.mxu0 0.0
        %478 = vmatprep.subr.mxu0 0.0
        %479 = vmatpush1.msra.mxu0 0.0
        %480 = vmatprep.subr.mxu0 0.0
        %481 = vmatpush1.msra.mxu0 0.0
        %482 = vmatprep.mubr.f32.mxu0 0.0
        %483 = vmatmul.mubr.f32.gmra.mrb[0].mxu0 %v416
        %v484 = vpop.f32.mrb[0].mxu0
        %v485 = vadd.f32 0.0, %v484
        %v486 = vpop.f32.mrb[0].mxu0
        %487 = vdwg.mxu0
        %v488 = vld [vmem:[#allocation10] sm:$0xff]
        %v489 = vld [vmem:[#allocation10 + $0x8] sm:$0xff]
        %v491 = vsel %vm414, %v410, 0
        %493 = vmatprep.subr.mxu0 0.0
        %494 = vmatpush1.msra.mxu0 %v488
        %495 = vmatprep.subr.mxu0 0.0
        %496 = vmatpush1.msra.mxu0 %v489
        %497 = vmatprep.subr.mxu0 0.0
        %498 = vmatpush1.msra.mxu0 0.0
        %499 = vmatprep.subr.mxu0 0.0
        %500 = vmatpush1.msra.mxu0 0.0
        %501 = vmatprep.subr.mxu0 0.0
        %502 = vmatpush1.msra.mxu0 0.0
        %503 = vmatprep.subr.mxu0 0.0
        %504 = vmatpush1.msra.mxu0 0.0
        %505 = vmatprep.subr.mxu0 0.0
        %506 = vmatpush1.msra.mxu0 0.0
        %507 = vmatprep.subr.mxu0 0.0
        %508 = vmatpush1.msra.mxu0 0.0
        %509 = vmatprep.subr.mxu0 0.0
        %510 = vmatpush1.msra.mxu0 0.0
        %511 = vmatprep.subr.mxu0 0.0
        %512 = vmatpush1.msra.mxu0 0.0
        %513 = vmatprep.subr.mxu0 0.0
        %514 = vmatpush1.msra.mxu0 0.0
        %515 = vmatprep.subr.mxu0 0.0
        %516 = vmatpush1.msra.mxu0 0.0
        %517 = vmatprep.subr.mxu0 0.0
        %518 = vmatpush1.msra.mxu0 0.0
        %519 = vmatprep.subr.mxu0 0.0
        %520 = vmatpush1.msra.mxu0 0.0
        %521 = vmatprep.subr.mxu0 0.0
        %522 = vmatpush1.msra.mxu0 0.0
        %523 = vmatprep.subr.mxu0 0.0
        %524 = vmatpush1.msra.mxu0 0.0
        %525 = vmatprep.subr.mxu0 0.0
        %526 = vmatpush1.msra.mxu0 0.0
        %527 = vmatprep.subr.mxu0 0.0
        %528 = vmatpush1.msra.mxu0 0.0
        %529 = vmatprep.subr.mxu0 0.0
        %530 = vmatpush1.msra.mxu0 0.0
        %531 = vmatprep.subr.mxu0 0.0
        %532 = vmatpush1.msra.mxu0 0.0
        %533 = vmatprep.subr.mxu0 0.0
        %534 = vmatpush1.msra.mxu0 0.0
        %535 = vmatprep.subr.mxu0 0.0
        %536 = vmatpush1.msra.mxu0 0.0
        %537 = vmatprep.subr.mxu0 0.0
        %538 = vmatpush1.msra.mxu0 0.0
        %539 = vmatprep.subr.mxu0 0.0
        %540 = vmatpush1.msra.mxu0 0.0
        %541 = vmatprep.subr.mxu0 0.0
        %542 = vmatpush1.msra.mxu0 0.0
        %543 = vmatprep.subr.mxu0 0.0
        %544 = vmatpush1.msra.mxu0 0.0
        %545 = vmatprep.subr.mxu0 0.0
        %546 = vmatpush1.msra.mxu0 0.0
        %547 = vmatprep.subr.mxu0 0.0
        %548 = vmatpush1.msra.mxu0 0.0
        %549 = vmatprep.subr.mxu0 0.0
        %550 = vmatpush1.msra.mxu0 0.0
        %551 = vmatprep.subr.mxu0 0.0
        %552 = vmatpush1.msra.mxu0 0.0
        %553 = vmatprep.subr.mxu0 0.0
        %554 = vmatpush1.msra.mxu0 0.0
        %555 = vmatprep.subr.mxu0 0.0
        %556 = vmatpush1.msra.mxu0 0.0
        %557 = vmatprep.mubr.f32.mxu0 0.0
        %558 = vmatmul.mubr.f32.gmra.mrb[0].mxu0 %v491
        %v559 = vpop.f32.mrb[0].mxu0
        %v560 = vadd.f32 0.0, %v559
        %v561 = vpop.f32.mrb[0].mxu0
        %562 = vdwg.mxu0
        %v563 = vld [vmem:[%s5] sm:$0xff]
        %v564 = vld [vmem:[%s5 + $0x8] sm:$0xff]
        %v566 = vsel %vm414, %v411, 0
        %568 = vmatprep.subr.mxu0 0.0
        %569 = vmatpush1.msra.mxu0 %v563
        %570 = vmatprep.subr.mxu0 0.0
        %571 = vmatpush1.msra.mxu0 %v564
        %572 = vmatprep.subr.mxu0 0.0
        %573 = vmatpush1.msra.mxu0 0.0
        %574 = vmatprep.subr.mxu0 0.0
        %575 = vmatpush1.msra.mxu0 0.0
        %576 = vmatprep.subr.mxu0 0.0
        %577 = vmatpush1.msra.mxu0 0.0
        %578 = vmatprep.subr.mxu0 0.0
        %579 = vmatpush1.msra.mxu0 0.0
        %580 = vmatprep.subr.mxu0 0.0
        %581 = vmatpush1.msra.mxu0 0.0
        %582 = vmatprep.subr.mxu0 0.0
        %583 = vmatpush1.msra.mxu0 0.0
        %584 = vmatprep.subr.mxu0 0.0
        %585 = vmatpush1.msra.mxu0 0.0
        %586 = vmatprep.subr.mxu0 0.0
        %587 = vmatpush1.msra.mxu0 0.0
        %588 = vmatprep.subr.mxu0 0.0
        %589 = vmatpush1.msra.mxu0 0.0
        %590 = vmatprep.subr.mxu0 0.0
        %591 = vmatpush1.msra.mxu0 0.0
        %592 = vmatprep.subr.mxu0 0.0
        %593 = vmatpush1.msra.mxu0 0.0
        %594 = vmatprep.subr.mxu0 0.0
        %595 = vmatpush1.msra.mxu0 0.0
        %596 = vmatprep.subr.mxu0 0.0
        %597 = vmatpush1.msra.mxu0 0.0
        %598 = vmatprep.subr.mxu0 0.0
        %599 = vmatpush1.msra.mxu0 0.0
        %600 = vmatprep.subr.mxu0 0.0
        %601 = vmatpush1.msra.mxu0 0.0
        %602 = vmatprep.subr.mxu0 0.0
        %603 = vmatpush1.msra.mxu0 0.0
        %604 = vmatprep.subr.mxu0 0.0
        %605 = vmatpush1.msra.mxu0 0.0
        %606 = vmatprep.subr.mxu0 0.0
        %607 = vmatpush1.msra.mxu0 0.0
        %608 = vmatprep.subr.mxu0 0.0
        %609 = vmatpush1.msra.mxu0 0.0
        %610 = vmatprep.subr.mxu0 0.0
        %611 = vmatpush1.msra.mxu0 0.0
        %612 = vmatprep.subr.mxu0 0.0
        %613 = vmatpush1.msra.mxu0 0.0
        %614 = vmatprep.subr.mxu0 0.0
        %615 = vmatpush1.msra.mxu0 0.0
        %616 = vmatprep.subr.mxu0 0.0
        %617 = vmatpush1.msra.mxu0 0.0
        %618 = vmatprep.subr.mxu0 0.0
        %619 = vmatpush1.msra.mxu0 0.0
        %620 = vmatprep.subr.mxu0 0.0
        %621 = vmatpush1.msra.mxu0 0.0
        %622 = vmatprep.subr.mxu0 0.0
        %623 = vmatpush1.msra.mxu0 0.0
        %624 = vmatprep.subr.mxu0 0.0
        %625 = vmatpush1.msra.mxu0 0.0
        %626 = vmatprep.subr.mxu0 0.0
        %627 = vmatpush1.msra.mxu0 0.0
        %628 = vmatprep.subr.mxu0 0.0
        %629 = vmatpush1.msra.mxu0 0.0
        %630 = vmatprep.subr.mxu0 0.0
        %631 = vmatpush1.msra.mxu0 0.0
        %632 = vmatprep.mubr.f32.mxu0 0.0
        %633 = vmatmul.mubr.f32.gmra.mrb[0].mxu0 %v566
        %v634 = vpop.f32.mrb[0].mxu0
        %v635 = vadd.f32 0.0, %v634
        %v636 = vpop.f32.mrb[0].mxu0
        %637 = vdwg.mxu0
        %vm638 = vcmask 64512
        %v640 = vsel %vm638, %v485, 0
        %v643 = vsel %vm638, %v560, 0
        %645 = vmatprep.subr.mxu0 0.0
        %646 = vmatpush1.xpose.msra.mxu0 %v643
        %647 = vmatprep.subr.mxu0 0.0
        %648 = vmatpush1.xpose.msra.mxu0 0.0
        %649 = vmatprep.subr.mxu0 0.0
        %650 = vmatpush1.xpose.msra.mxu0 0.0
        %651 = vmatprep.subr.mxu0 0.0
        %652 = vmatpush1.xpose.msra.mxu0 0.0
        %653 = vmatprep.subr.mxu0 0.0
        %654 = vmatpush1.xpose.msra.mxu0 0.0
        %655 = vmatprep.subr.mxu0 0.0
        %656 = vmatpush1.xpose.msra.mxu0 0.0
        %657 = vmatprep.subr.mxu0 0.0
        %658 = vmatpush1.xpose.msra.mxu0 0.0
        %659 = vmatprep.subr.mxu0 0.0
        %660 = vmatpush1.xpose.msra.mxu0 0.0
        %661 = vmatprep.subr.mxu0 0.0
        %662 = vmatpush1.xpose.msra.mxu0 0.0
        %663 = vmatprep.subr.mxu0 0.0
        %664 = vmatpush1.xpose.msra.mxu0 0.0
        %665 = vmatprep.subr.mxu0 0.0
        %666 = vmatpush1.xpose.msra.mxu0 0.0
        %667 = vmatprep.subr.mxu0 0.0
        %668 = vmatpush1.xpose.msra.mxu0 0.0
        %669 = vmatprep.subr.mxu0 0.0
        %670 = vmatpush1.xpose.msra.mxu0 0.0
        %671 = vmatprep.subr.mxu0 0.0
        %672 = vmatpush1.xpose.msra.mxu0 0.0
        %673 = vmatprep.subr.mxu0 0.0
        %674 = vmatpush1.xpose.msra.mxu0 0.0
        %675 = vmatprep.subr.mxu0 0.0
        %676 = vmatpush1.xpose.msra.mxu0 0.0
        %677 = vmatprep.subr.mxu0 0.0
        %678 = vmatpush1.xpose.msra.mxu0 0.0
        %679 = vmatprep.subr.mxu0 0.0
        %680 = vmatpush1.xpose.msra.mxu0 0.0
        %681 = vmatprep.subr.mxu0 0.0
        %682 = vmatpush1.xpose.msra.mxu0 0.0
        %683 = vmatprep.subr.mxu0 0.0
        %684 = vmatpush1.xpose.msra.mxu0 0.0
        %685 = vmatprep.subr.mxu0 0.0
        %686 = vmatpush1.xpose.msra.mxu0 0.0
        %687 = vmatprep.subr.mxu0 0.0
        %688 = vmatpush1.xpose.msra.mxu0 0.0
        %689 = vmatprep.subr.mxu0 0.0
        %690 = vmatpush1.xpose.msra.mxu0 0.0
        %691 = vmatprep.subr.mxu0 0.0
        %692 = vmatpush1.xpose.msra.mxu0 0.0
        %693 = vmatprep.subr.mxu0 0.0
        %694 = vmatpush1.xpose.msra.mxu0 0.0
        %695 = vmatprep.subr.mxu0 0.0
        %696 = vmatpush1.xpose.msra.mxu0 0.0
        %697 = vmatprep.subr.mxu0 0.0
        %698 = vmatpush1.xpose.msra.mxu0 0.0
        %699 = vmatprep.subr.mxu0 0.0
        %700 = vmatpush1.xpose.msra.mxu0 0.0
        %701 = vmatprep.subr.mxu0 0.0
        %702 = vmatpush1.xpose.msra.mxu0 0.0
        %703 = vmatprep.subr.mxu0 0.0
        %704 = vmatpush1.xpose.msra.mxu0 0.0
        %705 = vmatprep.subr.mxu0 0.0
        %706 = vmatpush1.xpose.msra.mxu0 0.0
        %707 = vmatprep.subr.mxu0 0.0
        %708 = vmatpush1.xpose.msra.mxu0 0.0
        %709 = vmatprep.mubr.f32.mxu0 0.0
        %710 = vmatmul.mubr.f32.gmra.mrb[0].mxu0 %v640
        %v711 = vpop.f32.mrb[0].mxu0
        %v712 = vadd.f32 0.0, %v711
        %v713 = vpop.f32.mrb[0].mxu0
        %714 = vdwg.mxu0
        %v715 = vmul.f32 %v712, 0.35355338
        %v716 = vsel %vm638, %v715, -inf
        %717 = vmax.xlane.f32.xlu0 %v716
        %v718 = vpop.xlane.xlu0 %717
        %v719 = vsub.f32 %v715, %v718
        %v720 = vmul.f32 %v719, 1.442695
        %v721 = vpow.pop %v720
        %v722 = vsel %vm638, %v721, 0.0
        %723 = vadd.xlane.f32.xlu0 %v722
        %v724 = vpop.xlane.xlu0 %723
        %v725 = vrcp.pop %v724
        %v726 = vmul.f32 %v721, %v725
        %v728 = vsel %vm638, %v726, 0
        %730 = vmatprep.subr.mxu0 0.0
        %731 = vmatpush1.msra.mxu0 %v635
        %732 = vmatprep.subr.mxu0 0.0
        %733 = vmatpush1.msra.mxu0 0.0
        %734 = vmatprep.subr.mxu0 0.0
        %735 = vmatpush1.msra.mxu0 0.0
        %736 = vmatprep.subr.mxu0 0.0
        %737 = vmatpush1.msra.mxu0 0.0
        %738 = vmatprep.subr.mxu0 0.0
        %739 = vmatpush1.msra.mxu0 0.0
        %740 = vmatprep.subr.mxu0 0.0
        %741 = vmatpush1.msra.mxu0 0.0
        %742 = vmatprep.subr.mxu0 0.0
        %743 = vmatpush1.msra.mxu0 0.0
        %744 = vmatprep.subr.mxu0 0.0
        %745 = vmatpush1.msra.mxu0 0.0
        %746 = vmatprep.subr.mxu0 0.0
        %747 = vmatpush1.msra.mxu0 0.0
        %748 = vmatprep.subr.mxu0 0.0
        %749 = vmatpush1.msra.mxu0 0.0
        %750 = vmatprep.subr.mxu0 0.0
        %751 = vmatpush1.msra.mxu0 0.0
        %752 = vmatprep.subr.mxu0 0.0
        %753 = vmatpush1.msra.mxu0 0.0
        %754 = vmatprep.subr.mxu0 0.0
        %755 = vmatpush1.msra.mxu0 0.0
        %756 = vmatprep.subr.mxu0 0.0
        %757 = vmatpush1.msra.mxu0 0.0
        %758 = vmatprep.subr.mxu0 0.0
        %759 = vmatpush1.msra.mxu0 0.0
        %760 = vmatprep.subr.mxu0 0.0
        %761 = vmatpush1.msra.mxu0 0.0
        %762 = vmatprep.subr.mxu0 0.0
        %763 = vmatpush1.msra.mxu0 0.0
        %764 = vmatprep.subr.mxu0 0.0
        %765 = vmatpush1.msra.mxu0 0.0
        %766 = vmatprep.subr.mxu0 0.0
        %767 = vmatpush1.msra.mxu0 0.0
        %768 = vmatprep.subr.mxu0 0.0
        %769 = vmatpush1.msra.mxu0 0.0
        %770 = vmatprep.subr.mxu0 0.0
        %771 = vmatpush1.msra.mxu0 0.0
        %772 = vmatprep.subr.mxu0 0.0
        %773 = vmatpush1.msra.mxu0 0.0
        %774 = vmatprep.subr.mxu0 0.0
        %775 = vmatpush1.msra.mxu0 0.0
        %776 = vmatprep.subr.mxu0 0.0
        %777 = vmatpush1.msra.mxu0 0.0
        %778 = vmatprep.subr.mxu0 0.0
        %779 = vmatpush1.msra.mxu0 0.0
        %780 = vmatprep.subr.mxu0 0.0
        %781 = vmatpush1.msra.mxu0 0.0
        %782 = vmatprep.subr.mxu0 0.0
        %783 = vmatpush1.msra.mxu0 0.0
        %784 = vmatprep.subr.mxu0 0.0
        %785 = vmatpush1.msra.mxu0 0.0
        %786 = vmatprep.subr.mxu0 0.0
        %787 = vmatpush1.msra.mxu0 0.0
        %788 = vmatprep.subr.mxu0 0.0
        %789 = vmatpush1.msra.mxu0 0.0
        %790 = vmatprep.subr.mxu0 0.0
        %791 = vmatpush1.msra.mxu0 0.0
        %792 = vmatprep.subr.mxu0 0.0
        %793 = vmatpush1.msra.mxu0 0.0
        %794 = vmatprep.mubr.f32.mxu0 0.0
        %795 = vmatmul.mubr.f32.gmra.mrb[0].mxu0 %v728
        %v796 = vpop.f32.mrb[0].mxu0
        %v797 = vadd.f32 0.0, %v796
        %v798 = vpop.f32.mrb[0].mxu0
        %799 = vdwg.mxu0
        %v800 = vld [vmem:[#allocation11] sm:$0xff]
        %801 = vrot.lane.b32.xlu0 %v485, 120
        %v802 = vpop.permute.xlu0 %801
        %803 = vrot.lane.b32.xlu0 %v560, 120
        %v804 = vpop.permute.xlu0 %803
        %v805 = vsel %vm638, %v802, 0
        %v807 = vsel %vm638, %v804, 0
        %809 = vmatprep.subr.mxu0 0.0
        %810 = vmatpush1.xpose.msra.mxu0 %v807
        %811 = vmatprep.subr.mxu0 0.0
        %812 = vmatpush1.xpose.msra.mxu0 0.0
        %813 = vmatprep.subr.mxu0 0.0
        %814 = vmatpush1.xpose.msra.mxu0 0.0
        %815 = vmatprep.subr.mxu0 0.0
        %816 = vmatpush1.xpose.msra.mxu0 0.0
        %817 = vmatprep.subr.mxu0 0.0
        %818 = vmatpush1.xpose.msra.mxu0 0.0
        %819 = vmatprep.subr.mxu0 0.0
        %820 = vmatpush1.xpose.msra.mxu0 0.0
        %821 = vmatprep.subr.mxu0 0.0
        %822 = vmatpush1.xpose.msra.mxu0 0.0
        %823 = vmatprep.subr.mxu0 0.0
        %824 = vmatpush1.xpose.msra.mxu0 0.0
        %825 = vmatprep.subr.mxu0 0.0
        %826 = vmatpush1.xpose.msra.mxu0 0.0
        %827 = vmatprep.subr.mxu0 0.0
        %828 = vmatpush1.xpose.msra.mxu0 0.0
        %829 = vmatprep.subr.mxu0 0.0
        %830 = vmatpush1.xpose.msra.mxu0 0.0
        %831 = vmatprep.subr.mxu0 0.0
        %832 = vmatpush1.xpose.msra.mxu0 0.0
        %833 = vmatprep.subr.mxu0 0.0
        %834 = vmatpush1.xpose.msra.mxu0 0.0
        %835 = vmatprep.subr.mxu0 0.0
        %836 = vmatpush1.xpose.msra.mxu0 0.0
        %837 = vmatprep.subr.mxu0 0.0
        %838 = vmatpush1.xpose.msra.mxu0 0.0
        %839 = vmatprep.subr.mxu0 0.0
        %840 = vmatpush1.xpose.msra.mxu0 0.0
        %841 = vmatprep.subr.mxu0 0.0
        %842 = vmatpush1.xpose.msra.mxu0 0.0
        %843 = vmatprep.subr.mxu0 0.0
        %844 = vmatpush1.xpose.msra.mxu0 0.0
        %845 = vmatprep.subr.mxu0 0.0
        %846 = vmatpush1.xpose.msra.mxu0 0.0
        %847 = vmatprep.subr.mxu0 0.0
        %848 = vmatpush1.xpose.msra.mxu0 0.0
        %849 = vmatprep.subr.mxu0 0.0
        %850 = vmatpush1.xpose.msra.mxu0 0.0
        %851 = vmatprep.subr.mxu0 0.0
        %852 = vmatpush1.xpose.msra.mxu0 0.0
        %853 = vmatprep.subr.mxu0 0.0
        %854 = vmatpush1.xpose.msra.mxu0 0.0
        %855 = vmatprep.subr.mxu0 0.0
        %856 = vmatpush1.xpose.msra.mxu0 0.0
        %857 = vmatprep.subr.mxu0 0.0
        %858 = vmatpush1.xpose.msra.mxu0 0.0
        %859 = vmatprep.subr.mxu0 0.0
        %860 = vmatpush1.xpose.msra.mxu0 0.0
        %861 = vmatprep.subr.mxu0 0.0
        %862 = vmatpush1.xpose.msra.mxu0 0.0
        %863 = vmatprep.subr.mxu0 0.0
        %864 = vmatpush1.xpose.msra.mxu0 0.0
        %865 = vmatprep.subr.mxu0 0.0
        %866 = vmatpush1.xpose.msra.mxu0 0.0
        %867 = vmatprep.subr.mxu0 0.0
        %868 = vmatpush1.xpose.msra.mxu0 0.0
        %869 = vmatprep.subr.mxu0 0.0
        %870 = vmatpush1.xpose.msra.mxu0 0.0
        %871 = vmatprep.subr.mxu0 0.0
        %872 = vmatpush1.xpose.msra.mxu0 0.0
        %873 = vmatprep.mubr.f32.mxu0 0.0
        %874 = vmatmul.mubr.f32.gmra.mrb[0].mxu0 %v805
        %v875 = vpop.f32.mrb[0].mxu0
        %v876 = vadd.f32 0.0, %v875
        %v877 = vpop.f32.mrb[0].mxu0
        %878 = vdwg.mxu0
        %v879 = vmul.f32 %v876, 0.35355338
        %v880 = vsel %vm638, %v879, -inf
        %881 = vmax.xlane.f32.xlu0 %v880
        %v882 = vpop.xlane.xlu0 %881
        %v883 = vsub.f32 %v879, %v882
        %v884 = vmul.f32 %v883, 1.442695
        %v885 = vpow.pop %v884
        %v886 = vsel %vm638, %v885, 0.0
        %887 = vadd.xlane.f32.xlu0 %v886
        %v888 = vpop.xlane.xlu0 %887
        %v889 = vrcp.pop %v888
        %v890 = vmul.f32 %v885, %v889
        %892 = vrot.lane.b32.xlu0 %v635, 120
        %v893 = vpop.permute.xlu0 %892
        %v896 = vsel %vm638, %v890, 0
        %898 = vmatprep.subr.mxu0 0.0
        %899 = vmatpush1.msra.mxu0 %v893
        %900 = vmatprep.subr.mxu0 0.0
        %901 = vmatpush1.msra.mxu0 0.0
        %902 = vmatprep.subr.mxu0 0.0
        %903 = vmatpush1.msra.mxu0 0.0
        %904 = vmatprep.subr.mxu0 0.0
        %905 = vmatpush1.msra.mxu0 0.0
        %906 = vmatprep.subr.mxu0 0.0
        %907 = vmatpush1.msra.mxu0 0.0
        %908 = vmatprep.subr.mxu0 0.0
        %909 = vmatpush1.msra.mxu0 0.0
        %910 = vmatprep.subr.mxu0 0.0
        %911 = vmatpush1.msra.mxu0 0.0
        %912 = vmatprep.subr.mxu0 0.0
        %913 = vmatpush1.msra.mxu0 0.0
        %914 = vmatprep.subr.mxu0 0.0
        %915 = vmatpush1.msra.mxu0 0.0
        %916 = vmatprep.subr.mxu0 0.0
        %917 = vmatpush1.msra.mxu0 0.0
        %918 = vmatprep.subr.mxu0 0.0
        %919 = vmatpush1.msra.mxu0 0.0
        %920 = vmatprep.subr.mxu0 0.0
        %921 = vmatpush1.msra.mxu0 0.0
        %922 = vmatprep.subr.mxu0 0.0
        %923 = vmatpush1.msra.mxu0 0.0
        %924 = vmatprep.subr.mxu0 0.0
        %925 = vmatpush1.msra.mxu0 0.0
        %926 = vmatprep.subr.mxu0 0.0
        %927 = vmatpush1.msra.mxu0 0.0
        %928 = vmatprep.subr.mxu0 0.0
        %929 = vmatpush1.msra.mxu0 0.0
        %930 = vmatprep.subr.mxu0 0.0
        %931 = vmatpush1.msra.mxu0 0.0
        %932 = vmatprep.subr.mxu0 0.0
        %933 = vmatpush1.msra.mxu0 0.0
        %934 = vmatprep.subr.mxu0 0.0
        %935 = vmatpush1.msra.mxu0 0.0
        %936 = vmatprep.subr.mxu0 0.0
        %937 = vmatpush1.msra.mxu0 0.0
        %938 = vmatprep.subr.mxu0 0.0
        %939 = vmatpush1.msra.mxu0 0.0
        %940 = vmatprep.subr.mxu0 0.0
        %941 = vmatpush1.msra.mxu0 0.0
        %942 = vmatprep.subr.mxu0 0.0
        %943 = vmatpush1.msra.mxu0 0.0
        %944 = vmatprep.subr.mxu0 0.0
        %945 = vmatpush1.msra.mxu0 0.0
        %946 = vmatprep.subr.mxu0 0.0
        %947 = vmatpush1.msra.mxu0 0.0
        %948 = vmatprep.subr.mxu0 0.0
        %949 = vmatpush1.msra.mxu0 0.0
        %950 = vmatprep.subr.mxu0 0.0
        %951 = vmatpush1.msra.mxu0 0.0
        %952 = vmatprep.subr.mxu0 0.0
        %953 = vmatpush1.msra.mxu0 0.0
        %954 = vmatprep.subr.mxu0 0.0
        %955 = vmatpush1.msra.mxu0 0.0
        %956 = vmatprep.subr.mxu0 0.0
        %957 = vmatpush1.msra.mxu0 0.0
        %958 = vmatprep.subr.mxu0 0.0
        %959 = vmatpush1.msra.mxu0 0.0
        %960 = vmatprep.subr.mxu0 0.0
        %961 = vmatpush1.msra.mxu0 0.0
        %962 = vmatprep.mubr.f32.mxu0 0.0
        %963 = vmatmul.mubr.f32.gmra.mrb[0].mxu0 %v896
        %v964 = vpop.f32.mrb[0].mxu0
        %v965 = vadd.f32 0.0, %v964
        %v966 = vpop.f32.mrb[0].mxu0
        %967 = vdwg.mxu0
        %v968 = vld [vmem:[#allocation11 + $0x8] sm:$0xff]
        %v970 = vsel %vm638, %v965, 0
        %972 = vmatprep.subr.mxu0 0.0
        %973 = vmatpush1.msra.mxu0 %v968
        %974 = vmatprep.subr.mxu0 0.0
        %975 = vmatpush1.msra.mxu0 0.0
        %976 = vmatprep.subr.mxu0 0.0
        %977 = vmatpush1.msra.mxu0 0.0
        %978 = vmatprep.subr.mxu0 0.0
        %979 = vmatpush1.msra.mxu0 0.0
        %980 = vmatprep.subr.mxu0 0.0
        %981 = vmatpush1.msra.mxu0 0.0
        %982 = vmatprep.subr.mxu0 0.0
        %983 = vmatpush1.msra.mxu0 0.0
        %984 = vmatprep.subr.mxu0 0.0
        %985 = vmatpush1.msra.mxu0 0.0
        %986 = vmatprep.subr.mxu0 0.0
        %987 = vmatpush1.msra.mxu0 0.0
        %988 = vmatprep.subr.mxu0 0.0
        %989 = vmatpush1.msra.mxu0 0.0
        %990 = vmatprep.subr.mxu0 0.0
        %991 = vmatpush1.msra.mxu0 0.0
        %992 = vmatprep.subr.mxu0 0.0
        %993 = vmatpush1.msra.mxu0 0.0
        %994 = vmatprep.subr.mxu0 0.0
        %995 = vmatpush1.msra.mxu0 0.0
        %996 = vmatprep.subr.mxu0 0.0
        %997 = vmatpush1.msra.mxu0 0.0
        %998 = vmatprep.subr.mxu0 0.0
        %999 = vmatpush1.msra.mxu0 0.0
        %1000 = vmatprep.subr.mxu0 0.0
        %1001 = vmatpush1.msra.mxu0 0.0
        %1002 = vmatprep.subr.mxu0 0.0
        %1003 = vmatpush1.msra.mxu0 0.0
        %1004 = vmatprep.subr.mxu0 0.0
        %1005 = vmatpush1.msra.mxu0 0.0
        %1006 = vmatprep.subr.mxu0 0.0
        %1007 = vmatpush1.msra.mxu0 0.0
        %1008 = vmatprep.subr.mxu0 0.0
        %1009 = vmatpush1.msra.mxu0 0.0
        %1010 = vmatprep.subr.mxu0 0.0
        %1011 = vmatpush1.msra.mxu0 0.0
        %1012 = vmatprep.subr.mxu0 0.0
        %1013 = vmatpush1.msra.mxu0 0.0
        %1014 = vmatprep.subr.mxu0 0.0
        %1015 = vmatpush1.msra.mxu0 0.0
        %1016 = vmatprep.subr.mxu0 0.0
        %1017 = vmatpush1.msra.mxu0 0.0
        %1018 = vmatprep.subr.mxu0 0.0
        %1019 = vmatpush1.msra.mxu0 0.0
        %1020 = vmatprep.subr.mxu0 0.0
        %1021 = vmatpush1.msra.mxu0 0.0
        %1022 = vmatprep.subr.mxu0 0.0
        %1023 = vmatpush1.msra.mxu0 0.0
        %1024 = vmatprep.subr.mxu0 0.0
        %1025 = vmatpush1.msra.mxu0 0.0
        %1026 = vmatprep.subr.mxu0 0.0
        %1027 = vmatpush1.msra.mxu0 0.0
        %1028 = vmatprep.subr.mxu0 0.0
        %1029 = vmatpush1.msra.mxu0 0.0
        %1030 = vmatprep.subr.mxu0 0.0
        %1031 = vmatpush1.msra.mxu0 0.0
        %1032 = vmatprep.subr.mxu0 0.0
        %1033 = vmatpush1.msra.mxu0 0.0
        %1034 = vmatprep.subr.mxu0 0.0
        %1035 = vmatpush1.msra.mxu0 0.0
        %1036 = vmatprep.mubr.f32.mxu0 0.0
        %1037 = vmatmul.mubr.f32.gmra.mrb[0].mxu0 %v970
        %v1038 = vpop.f32.mrb[0].mxu0
        %v1039 = vadd.f32 0.0, %v1038
        %v1040 = vpop.f32.mrb[0].mxu0
        %1041 = vdwg.mxu0
        %v1043 = vsel %vm638, %v797, 0
        %1045 = vmatprep.subr.mxu0 0.0
        %1046 = vmatpush1.msra.mxu0 %v800
        %1047 = vmatprep.subr.mxu0 0.0
        %1048 = vmatpush1.msra.mxu0 0.0
        %1049 = vmatprep.subr.mxu0 0.0
        %1050 = vmatpush1.msra.mxu0 0.0
        %1051 = vmatprep.subr.mxu0 0.0
        %1052 = vmatpush1.msra.mxu0 0.0
        %1053 = vmatprep.subr.mxu0 0.0
        %1054 = vmatpush1.msra.mxu0 0.0
        %1055 = vmatprep.subr.mxu0 0.0
        %1056 = vmatpush1.msra.mxu0 0.0
        %1057 = vmatprep.subr.mxu0 0.0
        %1058 = vmatpush1.msra.mxu0 0.0
        %1059 = vmatprep.subr.mxu0 0.0
        %1060 = vmatpush1.msra.mxu0 0.0
        %1061 = vmatprep.subr.mxu0 0.0
        %1062 = vmatpush1.msra.mxu0 0.0
        %1063 = vmatprep.subr.mxu0 0.0
        %1064 = vmatpush1.msra.mxu0 0.0
        %1065 = vmatprep.subr.mxu0 0.0
        %1066 = vmatpush1.msra.mxu0 0.0
        %1067 = vmatprep.subr.mxu0 0.0
        %1068 = vmatpush1.msra.mxu0 0.0
        %1069 = vmatprep.subr.mxu0 0.0
        %1070 = vmatpush1.msra.mxu0 0.0
        %1071 = vmatprep.subr.mxu0 0.0
        %1072 = vmatpush1.msra.mxu0 0.0
        %1073 = vmatprep.subr.mxu0 0.0
        %1074 = vmatpush1.msra.mxu0 0.0
        %1075 = vmatprep.subr.mxu0 0.0
        %1076 = vmatpush1.msra.mxu0 0.0
        %1077 = vmatprep.subr.mxu0 0.0
        %1078 = vmatpush1.msra.mxu0 0.0
        %1079 = vmatprep.subr.mxu0 0.0
        %1080 = vmatpush1.msra.mxu0 0.0
        %1081 = vmatprep.subr.mxu0 0.0
        %1082 = vmatpush1.msra.mxu0 0.0
        %1083 = vmatprep.subr.mxu0 0.0
        %1084 = vmatpush1.msra.mxu0 0.0
        %1085 = vmatprep.subr.mxu0 0.0
        %1086 = vmatpush1.msra.mxu0 0.0
        %1087 = vmatprep.subr.mxu0 0.0
        %1088 = vmatpush1.msra.mxu0 0.0
        %1089 = vmatprep.subr.mxu0 0.0
        %1090 = vmatpush1.msra.mxu0 0.0
        %1091 = vmatprep.subr.mxu0 0.0
        %1092 = vmatpush1.msra.mxu0 0.0
        %1093 = vmatprep.subr.mxu0 0.0
        %1094 = vmatpush1.msra.mxu0 0.0
        %1095 = vmatprep.subr.mxu0 0.0
        %1096 = vmatpush1.msra.mxu0 0.0
        %1097 = vmatprep.subr.mxu0 0.0
        %1098 = vmatpush1.msra.mxu0 0.0
        %1099 = vmatprep.subr.mxu0 0.0
        %1100 = vmatpush1.msra.mxu0 0.0
        %1101 = vmatprep.subr.mxu0 0.0
        %1102 = vmatpush1.msra.mxu0 0.0
        %1103 = vmatprep.subr.mxu0 0.0
        %1104 = vmatpush1.msra.mxu0 0.0
        %1105 = vmatprep.subr.mxu0 0.0
        %1106 = vmatpush1.msra.mxu0 0.0
        %1107 = vmatprep.subr.mxu0 0.0
        %1108 = vmatpush1.msra.mxu0 0.0
        %1109 = vmatprep.mubr.f32.mxu0 0.0
        %1110 = vmatmul.mubr.f32.gmra.mrb[0].mxu0 %v1043
        %v1111 = vpop.f32.mrb[0].mxu0
        %v1112 = vadd.f32 %v1039, %v1111
        %v1113 = vpop.f32.mrb[0].mxu0
        %1114 = vdwg.mxu0
        %1115 = vrot.lane.b32.xlu0 %v485, 112
        %v1116 = vpop.permute.xlu0 %1115
        %1117 = vrot.lane.b32.xlu0 %v560, 112
        %v1118 = vpop.permute.xlu0 %1117
        %v1119 = vsel %vm638, %v1116, 0
        %v1121 = vsel %vm638, %v1118, 0
        %1123 = vmatprep.subr.mxu0 0.0
        %1124 = vmatpush1.xpose.msra.mxu0 %v1121
        %1125 = vmatprep.subr.mxu0 0.0
        %1126 = vmatpush1.xpose.msra.mxu0 0.0
        %1127 = vmatprep.subr.mxu0 0.0
        %1128 = vmatpush1.xpose.msra.mxu0 0.0
        %1129 = vmatprep.subr.mxu0 0.0
        %1130 = vmatpush1.xpose.msra.mxu0 0.0
        %1131 = vmatprep.subr.mxu0 0.0
        %1132 = vmatpush1.xpose.msra.mxu0 0.0
        %1133 = vmatprep.subr.mxu0 0.0
        %1134 = vmatpush1.xpose.msra.mxu0 0.0
        %1135 = vmatprep.subr.mxu0 0.0
        %1136 = vmatpush1.xpose.msra.mxu0 0.0
        %1137 = vmatprep.subr.mxu0 0.0
        %1138 = vmatpush1.xpose.msra.mxu0 0.0
        %1139 = vmatprep.subr.mxu0 0.0
        %1140 = vmatpush1.xpose.msra.mxu0 0.0
        %1141 = vmatprep.subr.mxu0 0.0
        %1142 = vmatpush1.xpose.msra.mxu0 0.0
        %1143 = vmatprep.subr.mxu0 0.0
        %1144 = vmatpush1.xpose.msra.mxu0 0.0
        %1145 = vmatprep.subr.mxu0 0.0
        %1146 = vmatpush1.xpose.msra.mxu0 0.0
        %1147 = vmatprep.subr.mxu0 0.0
        %1148 = vmatpush1.xpose.msra.mxu0 0.0
        %1149 = vmatprep.subr.mxu0 0.0
        %1150 = vmatpush1.xpose.msra.mxu0 0.0
        %1151 = vmatprep.subr.mxu0 0.0
        %1152 = vmatpush1.xpose.msra.mxu0 0.0
        %1153 = vmatprep.subr.mxu0 0.0
        %1154 = vmatpush1.xpose.msra.mxu0 0.0
        %1155 = vmatprep.subr.mxu0 0.0
        %1156 = vmatpush1.xpose.msra.mxu0 0.0
        %1157 = vmatprep.subr.mxu0 0.0
        %1158 = vmatpush1.xpose.msra.mxu0 0.0
        %1159 = vmatprep.subr.mxu0 0.0
        %1160 = vmatpush1.xpose.msra.mxu0 0.0
        %1161 = vmatprep.subr.mxu0 0.0
        %1162 = vmatpush1.xpose.msra.mxu0 0.0
        %1163 = vmatprep.subr.mxu0 0.0
        %1164 = vmatpush1.xpose.msra.mxu0 0.0
        %1165 = vmatprep.subr.mxu0 0.0
        %1166 = vmatpush1.xpose.msra.mxu0 0.0
        %1167 = vmatprep.subr.mxu0 0.0
        %1168 = vmatpush1.xpose.msra.mxu0 0.0
        %1169 = vmatprep.subr.mxu0 0.0
        %1170 = vmatpush1.xpose.msra.mxu0 0.0
        %1171 = vmatprep.subr.mxu0 0.0
        %1172 = vmatpush1.xpose.msra.mxu0 0.0
        %1173 = vmatprep.subr.mxu0 0.0
        %1174 = vmatpush1.xpose.msra.mxu0 0.0
        %1175 = vmatprep.subr.mxu0 0.0
        %1176 = vmatpush1.xpose.msra.mxu0 0.0
        %1177 = vmatprep.subr.mxu0 0.0
        %1178 = vmatpush1.xpose.msra.mxu0 0.0
        %1179 = vmatprep.subr.mxu0 0.0
        %1180 = vmatpush1.xpose.msra.mxu0 0.0
        %1181 = vmatprep.subr.mxu0 0.0
        %1182 = vmatpush1.xpose.msra.mxu0 0.0
        %1183 = vmatprep.subr.mxu0 0.0
        %1184 = vmatpush1.xpose.msra.mxu0 0.0
        %1185 = vmatprep.subr.mxu0 0.0
        %1186 = vmatpush1.xpose.msra.mxu0 0.0
        %1187 = vmatprep.mubr.f32.mxu0 0.0
        %1188 = vmatmul.mubr.f32.gmra.mrb[0].mxu0 %v1119
        %v1189 = vpop.f32.mrb[0].mxu0
        %v1190 = vadd.f32 0.0, %v1189
        %v1191 = vpop.f32.mrb[0].mxu0
        %1192 = vdwg.mxu0
        %v1193 = vmul.f32 %v1190, 0.35355338
        %v1194 = vsel %vm638, %v1193, -inf
        %1195 = vmax.xlane.f32.xlu0 %v1194
        %v1196 = vpop.xlane.xlu0 %1195
        %v1197 = vsub.f32 %v1193, %v1196
        %v1198 = vmul.f32 %v1197, 1.442695
        %v1199 = vpow.pop %v1198
        %v1200 = vsel %vm638, %v1199, 0.0
        %1201 = vadd.xlane.f32.xlu0 %v1200
        %v1202 = vpop.xlane.xlu0 %1201
        %v1203 = vrcp.pop %v1202
        %v1204 = vmul.f32 %v1199, %v1203
        %1205 = vrot.lane.b32.xlu0 %v635, 112
        %v1206 = vpop.permute.xlu0 %1205
        %v1209 = vsel %vm638, %v1204, 0
        %1211 = vmatprep.subr.mxu0 0.0
        %1212 = vmatpush1.msra.mxu0 %v1206
        %1213 = vmatprep.subr.mxu0 0.0
        %1214 = vmatpush1.msra.mxu0 0.0
        %1215 = vmatprep.subr.mxu0 0.0
        %1216 = vmatpush1.msra.mxu0 0.0
        %1217 = vmatprep.subr.mxu0 0.0
        %1218 = vmatpush1.msra.mxu0 0.0
        %1219 = vmatprep.subr.mxu0 0.0
        %1220 = vmatpush1.msra.mxu0 0.0
        %1221 = vmatprep.subr.mxu0 0.0
        %1222 = vmatpush1.msra.mxu0 0.0
        %1223 = vmatprep.subr.mxu0 0.0
        %1224 = vmatpush1.msra.mxu0 0.0
        %1225 = vmatprep.subr.mxu0 0.0
        %1226 = vmatpush1.msra.mxu0 0.0
        %1227 = vmatprep.subr.mxu0 0.0
        %1228 = vmatpush1.msra.mxu0 0.0
        %1229 = vmatprep.subr.mxu0 0.0
        %1230 = vmatpush1.msra.mxu0 0.0
        %1231 = vmatprep.subr.mxu0 0.0
        %1232 = vmatpush1.msra.mxu0 0.0
        %1233 = vmatprep.subr.mxu0 0.0
        %1234 = vmatpush1.msra.mxu0 0.0
        %1235 = vmatprep.subr.mxu0 0.0
        %1236 = vmatpush1.msra.mxu0 0.0
        %1237 = vmatprep.subr.mxu0 0.0
        %1238 = vmatpush1.msra.mxu0 0.0
        %1239 = vmatprep.subr.mxu0 0.0
        %1240 = vmatpush1.msra.mxu0 0.0
        %1241 = vmatprep.subr.mxu0 0.0
        %1242 = vmatpush1.msra.mxu0 0.0
        %1243 = vmatprep.subr.mxu0 0.0
        %1244 = vmatpush1.msra.mxu0 0.0
        %1245 = vmatprep.subr.mxu0 0.0
        %1246 = vmatpush1.msra.mxu0 0.0
        %1247 = vmatprep.subr.mxu0 0.0
        %1248 = vmatpush1.msra.mxu0 0.0
        %1249 = vmatprep.subr.mxu0 0.0
        %1250 = vmatpush1.msra.mxu0 0.0
        %1251 = vmatprep.subr.mxu0 0.0
        %1252 = vmatpush1.msra.mxu0 0.0
        %1253 = vmatprep.subr.mxu0 0.0
        %1254 = vmatpush1.msra.mxu0 0.0
        %1255 = vmatprep.subr.mxu0 0.0
        %1256 = vmatpush1.msra.mxu0 0.0
        %1257 = vmatprep.subr.mxu0 0.0
        %1258 = vmatpush1.msra.mxu0 0.0
        %1259 = vmatprep.subr.mxu0 0.0
        %1260 = vmatpush1.msra.mxu0 0.0
        %1261 = vmatprep.subr.mxu0 0.0
        %1262 = vmatpush1.msra.mxu0 0.0
        %1263 = vmatprep.subr.mxu0 0.0
        %1264 = vmatpush1.msra.mxu0 0.0
        %1265 = vmatprep.subr.mxu0 0.0
        %1266 = vmatpush1.msra.mxu0 0.0
        %1267 = vmatprep.subr.mxu0 0.0
        %1268 = vmatpush1.msra.mxu0 0.0
        %1269 = vmatprep.subr.mxu0 0.0
        %1270 = vmatpush1.msra.mxu0 0.0
        %1271 = vmatprep.subr.mxu0 0.0
        %1272 = vmatpush1.msra.mxu0 0.0
        %1273 = vmatprep.subr.mxu0 0.0
        %1274 = vmatpush1.msra.mxu0 0.0
        %1275 = vmatprep.mubr.f32.mxu0 0.0
        %1276 = vmatmul.mubr.f32.gmra.mrb[0].mxu0 %v1209
        %v1277 = vpop.f32.mrb[0].mxu0
        %v1278 = vadd.f32 0.0, %v1277
        %v1279 = vpop.f32.mrb[0].mxu0
        %1280 = vdwg.mxu0
        %v1281 = vld [vmem:[#allocation11 + $0x10] sm:$0xff]
        %v1283 = vsel %vm638, %v1278, 0
        %1285 = vmatprep.subr.mxu0 0.0
        %1286 = vmatpush1.msra.mxu0 %v1281
        %1287 = vmatprep.subr.mxu0 0.0
        %1288 = vmatpush1.msra.mxu0 0.0
        %1289 = vmatprep.subr.mxu0 0.0
        %1290 = vmatpush1.msra.mxu0 0.0
        %1291 = vmatprep.subr.mxu0 0.0
        %1292 = vmatpush1.msra.mxu0 0.0
        %1293 = vmatprep.subr.mxu0 0.0
        %1294 = vmatpush1.msra.mxu0 0.0
        %1295 = vmatprep.subr.mxu0 0.0
        %1296 = vmatpush1.msra.mxu0 0.0
        %1297 = vmatprep.subr.mxu0 0.0
        %1298 = vmatpush1.msra.mxu0 0.0
        %1299 = vmatprep.subr.mxu0 0.0
        %1300 = vmatpush1.msra.mxu0 0.0
        %1301 = vmatprep.subr.mxu0 0.0
        %1302 = vmatpush1.msra.mxu0 0.0
        %1303 = vmatprep.subr.mxu0 0.0
        %1304 = vmatpush1.msra.mxu0 0.0
        %1305 = vmatprep.subr.mxu0 0.0
        %1306 = vmatpush1.msra.mxu0 0.0
        %1307 = vmatprep.subr.mxu0 0.0
        %1308 = vmatpush1.msra.mxu0 0.0
        %1309 = vmatprep.subr.mxu0 0.0
        %1310 = vmatpush1.msra.mxu0 0.0
        %1311 = vmatprep.subr.mxu0 0.0
        %1312 = vmatpush1.msra.mxu0 0.0
        %1313 = vmatprep.subr.mxu0 0.0
        %1314 = vmatpush1.msra.mxu0 0.0
        %1315 = vmatprep.subr.mxu0 0.0
        %1316 = vmatpush1.msra.mxu0 0.0
        %1317 = vmatprep.subr.mxu0 0.0
        %1318 = vmatpush1.msra.mxu0 0.0
        %1319 = vmatprep.subr.mxu0 0.0
        %1320 = vmatpush1.msra.mxu0 0.0
        %1321 = vmatprep.subr.mxu0 0.0
        %1322 = vmatpush1.msra.mxu0 0.0
        %1323 = vmatprep.subr.mxu0 0.0
        %1324 = vmatpush1.msra.mxu0 0.0
        %1325 = vmatprep.subr.mxu0 0.0
        %1326 = vmatpush1.msra.mxu0 0.0
        %1327 = vmatprep.subr.mxu0 0.0
        %1328 = vmatpush1.msra.mxu0 0.0
        %1329 = vmatprep.subr.mxu0 0.0
        %1330 = vmatpush1.msra.mxu0 0.0
        %1331 = vmatprep.subr.mxu0 0.0
        %1332 = vmatpush1.msra.mxu0 0.0
        %1333 = vmatprep.subr.mxu0 0.0
        %1334 = vmatpush1.msra.mxu0 0.0
        %1335 = vmatprep.subr.mxu0 0.0
        %1336 = vmatpush1.msra.mxu0 0.0
        %1337 = vmatprep.subr.mxu0 0.0
        %1338 = vmatpush1.msra.mxu0 0.0
        %1339 = vmatprep.subr.mxu0 0.0
        %1340 = vmatpush1.msra.mxu0 0.0
        %1341 = vmatprep.subr.mxu0 0.0
        %1342 = vmatpush1.msra.mxu0 0.0
        %1343 = vmatprep.subr.mxu0 0.0
        %1344 = vmatpush1.msra.mxu0 0.0
        %1345 = vmatprep.subr.mxu0 0.0
        %1346 = vmatpush1.msra.mxu0 0.0
        %1347 = vmatprep.subr.mxu0 0.0
        %1348 = vmatpush1.msra.mxu0 0.0
        %1349 = vmatprep.mubr.f32.mxu0 0.0
        %1350 = vmatmul.mubr.f32.gmra.mrb[0].mxu0 %v1283
        %v1351 = vpop.f32.mrb[0].mxu0
        %v1352 = vadd.f32 0.0, %v1351
        %v1353 = vpop.f32.mrb[0].mxu0
        %1354 = vdwg.mxu0
        %v1355 = vadd.f32 %v1112, %v1352
        %1356 = vrot.lane.b32.xlu0 %v485, 104
        %v1357 = vpop.permute.xlu0 %1356
        %1358 = vrot.lane.b32.xlu0 %v560, 104
        %v1359 = vpop.permute.xlu0 %1358
        %v1360 = vsel %vm638, %v1357, 0
        %v1362 = vsel %vm638, %v1359, 0
        %1364 = vmatprep.subr.mxu0 0.0
        %1365 = vmatpush1.xpose.msra.mxu0 %v1362
        %1366 = vmatprep.subr.mxu0 0.0
        %1367 = vmatpush1.xpose.msra.mxu0 0.0
        %1368 = vmatprep.subr.mxu0 0.0
        %1369 = vmatpush1.xpose.msra.mxu0 0.0
        %1370 = vmatprep.subr.mxu0 0.0
        %1371 = vmatpush1.xpose.msra.mxu0 0.0
        %1372 = vmatprep.subr.mxu0 0.0
        %1373 = vmatpush1.xpose.msra.mxu0 0.0
        %1374 = vmatprep.subr.mxu0 0.0
        %1375 = vmatpush1.xpose.msra.mxu0 0.0
        %1376 = vmatprep.subr.mxu0 0.0
        %1377 = vmatpush1.xpose.msra.mxu0 0.0
        %1378 = vmatprep.subr.mxu0 0.0
        %1379 = vmatpush1.xpose.msra.mxu0 0.0
        %1380 = vmatprep.subr.mxu0 0.0
        %1381 = vmatpush1.xpose.msra.mxu0 0.0
        %1382 = vmatprep.subr.mxu0 0.0
        %1383 = vmatpush1.xpose.msra.mxu0 0.0
        %1384 = vmatprep.subr.mxu0 0.0
        %1385 = vmatpush1.xpose.msra.mxu0 0.0
        %1386 = vmatprep.subr.mxu0 0.0
        %1387 = vmatpush1.xpose.msra.mxu0 0.0
        %1388 = vmatprep.subr.mxu0 0.0
        %1389 = vmatpush1.xpose.msra.mxu0 0.0
        %1390 = vmatprep.subr.mxu0 0.0
        %1391 = vmatpush1.xpose.msra.mxu0 0.0
        %1392 = vmatprep.subr.mxu0 0.0
        %1393 = vmatpush1.xpose.msra.mxu0 0.0
        %1394 = vmatprep.subr.mxu0 0.0
        %1395 = vmatpush1.xpose.msra.mxu0 0.0
        %1396 = vmatprep.subr.mxu0 0.0
        %1397 = vmatpush1.xpose.msra.mxu0 0.0
        %1398 = vmatprep.subr.mxu0 0.0
        %1399 = vmatpush1.xpose.msra.mxu0 0.0
        %1400 = vmatprep.subr.mxu0 0.0
        %1401 = vmatpush1.xpose.msra.mxu0 0.0
        %1402 = vmatprep.subr.mxu0 0.0
        %1403 = vmatpush1.xpose.msra.mxu0 0.0
        %1404 = vmatprep.subr.mxu0 0.0
        %1405 = vmatpush1.xpose.msra.mxu0 0.0
        %1406 = vmatprep.subr.mxu0 0.0
        %1407 = vmatpush1.xpose.msra.mxu0 0.0
        %1408 = vmatprep.subr.mxu0 0.0
        %1409 = vmatpush1.xpose.msra.mxu0 0.0
        %1410 = vmatprep.subr.mxu0 0.0
        %1411 = vmatpush1.xpose.msra.mxu0 0.0
        %1412 = vmatprep.subr.mxu0 0.0
        %1413 = vmatpush1.xpose.msra.mxu0 0.0
        %1414 = vmatprep.subr.mxu0 0.0
        %1415 = vmatpush1.xpose.msra.mxu0 0.0
        %1416 = vmatprep.subr.mxu0 0.0
        %1417 = vmatpush1.xpose.msra.mxu0 0.0
        %1418 = vmatprep.subr.mxu0 0.0
        %1419 = vmatpush1.xpose.msra.mxu0 0.0
        %1420 = vmatprep.subr.mxu0 0.0
        %1421 = vmatpush1.xpose.msra.mxu0 0.0
        %1422 = vmatprep.subr.mxu0 0.0
        %1423 = vmatpush1.xpose.msra.mxu0 0.0
        %1424 = vmatprep.subr.mxu0 0.0
        %1425 = vmatpush1.xpose.msra.mxu0 0.0
        %1426 = vmatprep.subr.mxu0 0.0
        %1427 = vmatpush1.xpose.msra.mxu0 0.0
        %1428 = vmatprep.mubr.f32.mxu0 0.0
        %1429 = vmatmul.mubr.f32.gmra.mrb[0].mxu0 %v1360
        %v1430 = vpop.f32.mrb[0].mxu0
        %v1431 = vadd.f32 0.0, %v1430
        %v1432 = vpop.f32.mrb[0].mxu0
        %1433 = vdwg.mxu0
        %v1434 = vmul.f32 %v1431, 0.35355338
        %v1435 = vsel %vm638, %v1434, -inf
        %1436 = vmax.xlane.f32.xlu0 %v1435
        %v1437 = vpop.xlane.xlu0 %1436
        %v1438 = vsub.f32 %v1434, %v1437
        %v1439 = vmul.f32 %v1438, 1.442695
        %v1440 = vpow.pop %v1439
        %v1441 = vsel %vm638, %v1440, 0.0
        %1442 = vadd.xlane.f32.xlu0 %v1441
        %v1443 = vpop.xlane.xlu0 %1442
        %v1444 = vrcp.pop %v1443
        %v1445 = vmul.f32 %v1440, %v1444
        %1446 = vrot.lane.b32.xlu0 %v635, 104
        %v1447 = vpop.permute.xlu0 %1446
        %v1450 = vsel %vm638, %v1445, 0
        %1452 = vmatprep.subr.mxu0 0.0
        %1453 = vmatpush1.msra.mxu0 %v1447
        %1454 = vmatprep.subr.mxu0 0.0
        %1455 = vmatpush1.msra.mxu0 0.0
        %1456 = vmatprep.subr.mxu0 0.0
        %1457 = vmatpush1.msra.mxu0 0.0
        %1458 = vmatprep.subr.mxu0 0.0
        %1459 = vmatpush1.msra.mxu0 0.0
        %1460 = vmatprep.subr.mxu0 0.0
        %1461 = vmatpush1.msra.mxu0 0.0
        %1462 = vmatprep.subr.mxu0 0.0
        %1463 = vmatpush1.msra.mxu0 0.0
        %1464 = vmatprep.subr.mxu0 0.0
        %1465 = vmatpush1.msra.mxu0 0.0
        %1466 = vmatprep.subr.mxu0 0.0
        %1467 = vmatpush1.msra.mxu0 0.0
        %1468 = vmatprep.subr.mxu0 0.0
        %1469 = vmatpush1.msra.mxu0 0.0
        %1470 = vmatprep.subr.mxu0 0.0
        %1471 = vmatpush1.msra.mxu0 0.0
        %1472 = vmatprep.subr.mxu0 0.0
        %1473 = vmatpush1.msra.mxu0 0.0
        %1474 = vmatprep.subr.mxu0 0.0
        %1475 = vmatpush1.msra.mxu0 0.0
        %1476 = vmatprep.subr.mxu0 0.0
        %1477 = vmatpush1.msra.mxu0 0.0
        %1478 = vmatprep.subr.mxu0 0.0
        %1479 = vmatpush1.msra.mxu0 0.0
        %1480 = vmatprep.subr.mxu0 0.0
        %1481 = vmatpush1.msra.mxu0 0.0
        %1482 = vmatprep.subr.mxu0 0.0
        %1483 = vmatpush1.msra.mxu0 0.0
        %1484 = vmatprep.subr.mxu0 0.0
        %1485 = vmatpush1.msra.mxu0 0.0
        %1486 = vmatprep.subr.mxu0 0.0
        %1487 = vmatpush1.msra.mxu0 0.0
        %1488 = vmatprep.subr.mxu0 0.0
        %1489 = vmatpush1.msra.mxu0 0.0
        %1490 = vmatprep.subr.mxu0 0.0
        %1491 = vmatpush1.msra.mxu0 0.0
        %1492 = vmatprep.subr.mxu0 0.0
        %1493 = vmatpush1.msra.mxu0 0.0
        %1494 = vmatprep.subr.mxu0 0.0
        %1495 = vmatpush1.msra.mxu0 0.0
        %1496 = vmatprep.subr.mxu0 0.0
        %1497 = vmatpush1.msra.mxu0 0.0
        %1498 = vmatprep.subr.mxu0 0.0
        %1499 = vmatpush1.msra.mxu0 0.0
        %1500 = vmatprep.subr.mxu0 0.0
        %1501 = vmatpush1.msra.mxu0 0.0
        %1502 = vmatprep.subr.mxu0 0.0
        %1503 = vmatpush1.msra.mxu0 0.0
        %1504 = vmatprep.subr.mxu0 0.0
        %1505 = vmatpush1.msra.mxu0 0.0
        %1506 = vmatprep.subr.mxu0 0.0
        %1507 = vmatpush1.msra.mxu0 0.0
        %1508 = vmatprep.subr.mxu0 0.0
        %1509 = vmatpush1.msra.mxu0 0.0
        %1510 = vmatprep.subr.mxu0 0.0
        %1511 = vmatpush1.msra.mxu0 0.0
        %1512 = vmatprep.subr.mxu0 0.0
        %1513 = vmatpush1.msra.mxu0 0.0
        %1514 = vmatprep.subr.mxu0 0.0
        %1515 = vmatpush1.msra.mxu0 0.0
        %1516 = vmatprep.mubr.f32.mxu0 0.0
        %1517 = vmatmul.mubr.f32.gmra.mrb[0].mxu0 %v1450
        %v1518 = vpop.f32.mrb[0].mxu0
        %v1519 = vadd.f32 0.0, %v1518
        %v1520 = vpop.f32.mrb[0].mxu0
        %1521 = vdwg.mxu0
        %v1522 = vld [vmem:[#allocation11 + $0x18] sm:$0xff]
        %v1524 = vsel %vm638, %v1519, 0
        %1526 = vmatprep.subr.mxu0 0.0
        %1527 = vmatpush1.msra.mxu0 %v1522
        %1528 = vmatprep.subr.mxu0 0.0
        %1529 = vmatpush1.msra.mxu0 0.0
        %1530 = vmatprep.subr.mxu0 0.0
        %1531 = vmatpush1.msra.mxu0 0.0
        %1532 = vmatprep.subr.mxu0 0.0
        %1533 = vmatpush1.msra.mxu0 0.0
        %1534 = vmatprep.subr.mxu0 0.0
        %1535 = vmatpush1.msra.mxu0 0.0
        %1536 = vmatprep.subr.mxu0 0.0
        %1537 = vmatpush1.msra.mxu0 0.0
        %1538 = vmatprep.subr.mxu0 0.0
        %1539 = vmatpush1.msra.mxu0 0.0
        %1540 = vmatprep.subr.mxu0 0.0
        %1541 = vmatpush1.msra.mxu0 0.0
        %1542 = vmatprep.subr.mxu0 0.0
        %1543 = vmatpush1.msra.mxu0 0.0
        %1544 = vmatprep.subr.mxu0 0.0
        %1545 = vmatpush1.msra.mxu0 0.0
        %1546 = vmatprep.subr.mxu0 0.0
        %1547 = vmatpush1.msra.mxu0 0.0
        %1548 = vmatprep.subr.mxu0 0.0
        %1549 = vmatpush1.msra.mxu0 0.0
        %1550 = vmatprep.subr.mxu0 0.0
        %1551 = vmatpush1.msra.mxu0 0.0
        %1552 = vmatprep.subr.mxu0 0.0
        %1553 = vmatpush1.msra.mxu0 0.0
        %1554 = vmatprep.subr.mxu0 0.0
        %1555 = vmatpush1.msra.mxu0 0.0
        %1556 = vmatprep.subr.mxu0 0.0
        %1557 = vmatpush1.msra.mxu0 0.0
        %1558 = vmatprep.subr.mxu0 0.0
        %1559 = vmatpush1.msra.mxu0 0.0
        %1560 = vmatprep.subr.mxu0 0.0
        %1561 = vmatpush1.msra.mxu0 0.0
        %1562 = vmatprep.subr.mxu0 0.0
        %1563 = vmatpush1.msra.mxu0 0.0
        %1564 = vmatprep.subr.mxu0 0.0
        %1565 = vmatpush1.msra.mxu0 0.0
        %1566 = vmatprep.subr.mxu0 0.0
        %1567 = vmatpush1.msra.mxu0 0.0
        %1568 = vmatprep.subr.mxu0 0.0
        %1569 = vmatpush1.msra.mxu0 0.0
        %1570 = vmatprep.subr.mxu0 0.0
        %1571 = vmatpush1.msra.mxu0 0.0
        %1572 = vmatprep.subr.mxu0 0.0
        %1573 = vmatpush1.msra.mxu0 0.0
        %1574 = vmatprep.subr.mxu0 0.0
        %1575 = vmatpush1.msra.mxu0 0.0
        %1576 = vmatprep.subr.mxu0 0.0
        %1577 = vmatpush1.msra.mxu0 0.0
        %1578 = vmatprep.subr.mxu0 0.0
        %1579 = vmatpush1.msra.mxu0 0.0
        %1580 = vmatprep.subr.mxu0 0.0
        %1581 = vmatpush1.msra.mxu0 0.0
        %1582 = vmatprep.subr.mxu0 0.0
        %1583 = vmatpush1.msra.mxu0 0.0
        %1584 = vmatprep.subr.mxu0 0.0
        %1585 = vmatpush1.msra.mxu0 0.0
        %1586 = vmatprep.subr.mxu0 0.0
        %1587 = vmatpush1.msra.mxu0 0.0
        %1588 = vmatprep.subr.mxu0 0.0
        %1589 = vmatpush1.msra.mxu0 0.0
        %1590 = vmatprep.mubr.f32.mxu0 0.0
        %1591 = vmatmul.mubr.f32.gmra.mrb[0].mxu0 %v1524
        %v1592 = vpop.f32.mrb[0].mxu0
        %v1593 = vadd.f32 0.0, %v1592
        %v1594 = vpop.f32.mrb[0].mxu0
        %1595 = vdwg.mxu0
        %v1596 = vadd.f32 %v1355, %v1593
        %vm1597 = vcmask 261120
        %1598 = vst.msk [vmem:[%s408] sm:$0xff] %vm1597, %v1596
        %s1599 = sand.u32 %s199, 1
        %s1600 = scalar_lea.sflag [#allocation4], %s1599
        %s1601 = sand.u32 %s199, 1
        %s1602 = smul.addr %s1601, 8
        %s1603 = scalar_lea.vmem [#allocation13], %s1602
        // Predicated region
        $region73: #{tpu_custom_call.1} parent=47 // pred_check
          %p1604 = pneg %p209
        $region74: #{tpu_custom_call.1} parent=47 // pred_check_branch
          %1606 = sbr.rel (%p1604) target = $region76
        $region75: #{tpu_custom_call.1} parent=47 // pred_region
          %s1608 = ssub.s32 128, 128
          %1609 = vsyncadd %s1600, %s1608
          %s1610 = smul.addr %s29, 128
          %s1611 = scalar_lea.hbm %s7, %s1610
          %s1613 = sshll.u32 %s1603, 4
          %s1614 = int_to_ptr.vmem [resolvable:$true] %s1613
          %1616 = dma.vmem_to_hbm [thread:$0]  %s1614, 128, %s1611, %s1600
        $region76: #{tpu_custom_call.1} parent=47 // pred_fallthru
          _
      $region48: #{tpu_custom_call.1} parent=5 // pred_fallthru
        _
      %p1617 = scmp.le.s32.totalorder 2, %s24
      // Predicated region
      $region77: #{tpu_custom_call.1} parent=5 // pred_check
        %p1618 = pneg %p1617
      $region78: #{tpu_custom_call.1} parent=5 // pred_check_branch
        %1620 = sbr.rel (%p1618) target = $region80
      $region79: #{tpu_custom_call.1} parent=5 // pred_region
        %s1621 = ssub.s32 %s24, 2
        // Predicated region
        $region81: #{tpu_custom_call.1} parent=79 // pred_check
          %p1622 = pneg %p215
        $region82: #{tpu_custom_call.1} parent=79 // pred_check_branch
          %1624 = sbr.rel (%p1622) target = $region84
        $region83: #{tpu_custom_call.1} parent=79 // pred_region
          %s1625 = sand.u32 %s200, 1
          %s1626 = scalar_lea.sflag [#allocation4], %s1625
          %s1627 = sand.u32 %s200, 1
          %s1628 = smul.addr %s1627, 8
          %s1629 = scalar_lea.vmem [#allocation13], %s1628
          %1630 = dma.done %s1626, 128
        $region84: #{tpu_custom_call.1} parent=79 // pred_fallthru
          _
      $region80: #{tpu_custom_call.1} parent=5 // pred_fallthru
        _
    $region6: #{tpu_custom_call.1} parent=1 // loop_footer
      %s28 = sadd.s32 1, %s24
    $region7: #{tpu_custom_call.1} parent=1 // loop_footer_branch
      %23 = sbr.rel target = $region3
    $region8: #{tpu_custom_call.1} parent=1 // loop_exit
      _
    %1631 = vsyncpa [#allocation3], 1
    %s1632 = scalar_lea.sflag [#allocation3], 1
    %1633 = vsyncpa %s1632, 1
    %1634 = vsyncpa [#allocation6], 1
    %s1635 = scalar_lea.sflag [#allocation6], 1
    %1636 = vsyncpa %s1635, 1
    %1637 = vsyncpa [#allocation9], 1
    %1638 = vsyncpa [#allocation12], 1
    %1639 = vsyncpa [#allocation4], 1
    %s1640 = scalar_lea.sflag [#allocation4], 1
    %1641 = vsyncpa %s1640, 1

</llo_original>
